<compile_context>
chip_gen: v6e
topology: v6e:2x2x1
jax: 0.10.0
libtpu: 0.0.40
codegen_flags: <defaults>
</compile_context>

<pallas_src>
import functools

import jax
import jax.numpy as jnp
from jax.experimental import pallas as pl
from jax.experimental.pallas import tpu as pltpu


def _pick_row_tile(ho, per_row_bytes, budget_bytes=6 << 20):
    """Largest divisor of `ho` whose per-step footprint fits the budget."""
    best = 1
    for t in range(1, ho + 1):
        if ho % t == 0 and t * per_row_bytes <= budget_bytes:
            best = t
    # Keep at least two row tiles at small sizes so the pipeline has depth.
    if best == ho and ho % 2 == 0 and ho >= 4:
        best = ho // 2
    return best


# --------------------- resample_with_conv=True (3x3, stride 2) ---------------

def _conv_kernel(xm_ref, xb_ref, w_ref, b_ref, o_ref, *, T, Wo):
    """One (batch, row-tile) step of the stride-2 3x3 conv.

    xm_ref: (1, 4, T, Wp2, C)  parity-split padded input row-pairs of this tile
    xb_ref: (1, 4, 1, Wp2, C)  boundary row-pair (pair index T*(t+1))
    w_ref : (3, 3, C, C)       HWIO weights
    b_ref : (1, C)             bias (f32)
    o_ref : (1, T, Wo, C)      output tile
    """
    C = o_ref.shape[-1]
    # Bias-initialized f32 accumulator; one broadcast, hoisted out of the loops.
    acc = jnp.broadcast_to(b_ref[...].astype(jnp.float32), (T * Wo, C))

    for ky in range(3):
        # Full-width row planes (T, Wp2, C) for the two column parities this ky
        # uses.  The ky == 2 concat (row pairs 1..T, last pair from the
        # boundary block) is built once here, not once per kx.
        planes = []
        for cp in range(2):
            p = 2 * (ky % 2) + cp
            if ky < 2:
                planes.append(xm_ref[0, p])                        # (T, Wp2, C)
            elif T > 1:
                planes.append(jnp.concatenate(
                    [xm_ref[0, p, 1:T], xb_ref[0, p]], axis=0))    # (T, Wp2, C)
            else:
                planes.append(xb_ref[0, p])                        # (1, Wp2, C)
        for kx in range(3):
            c0 = kx // 2
            rows = planes[kx % 2][:, c0:c0 + Wo, :]                # (T, Wo, C)
            acc = acc + jnp.dot(rows.reshape(T * Wo, C), w_ref[ky, kx],
                                preferred_element_type=jnp.float32)

    o_ref[0] = acc.reshape(T, Wo, C).astype(o_ref.dtype)


def downsample_conv(x_nchw, weight_hwio, bias, kernel_size=3, compute_dtype=None):
    """Conv2d(C, C, kernel_size=3, stride=2, padding=1) on NCHW input."""
    # TODO(synk): only kernel_size=3 (the module default) has a fused path;
    # general K needs (K-1)//2 boundary row-pairs per tile.
    assert kernel_size == 3, "fused Pallas path implemented for kernel_size=3"
    K, pad = 3, 1
    B, C, H, W = x_nchw.shape
    Ho = (H + 2 * pad - K) // 2 + 1
    Wo = (W + 2 * pad - K) // 2 + 1
    Hp2, Wp2 = Ho + 1, Wo + 1                  # row/col pairs of padded input

    cdtype = jnp.dtype(compute_dtype) if compute_dtype is not None else x_nchw.dtype
    out_dtype = x_nchw.dtype
    esize = jnp.dtype(cdtype).itemsize
    osize = jnp.dtype(out_dtype).itemsize

    # NCHW -> NHWC -> zero-pad -> 2x2 space-to-depth: every conv tap becomes a
    # unit-stride slice in VMEM (no 9x im2col copy in HBM).
    x = jnp.transpose(x_nchw, (0, 2, 3, 1)).astype(cdtype)
    x = jnp.pad(x, ((0, 0),
                    (pad, 2 * Hp2 - H - pad),
                    (pad, 2 * Wp2 - W - pad),
                    (0, 0)))
    xs = x.reshape(B, Hp2, 2, Wp2, 2, C).transpose(0, 2, 4, 1, 3, 5)
    xs = xs.reshape(B, 4, Hp2, Wp2, C)         # parity p = 2*row_par + col_par

    # Row tiling over output rows.
    per_row = 4 * Wp2 * C * esize + Wo * C * (osize + 12)
    T = _pick_row_tile(Ho, per_row)
    n_tiles = Ho // T

    # Boundary row-pair needed by the ky=2 taps of tile t: pair index T*(t+1).
    bnd = xs[:, :, T::T, :, :]                 # (B, 4, n_tiles, Wp2, C)

    w = weight_hwio.astype(cdtype)             # (3, 3, C, C), HWIO
    b2 = bias.astype(jnp.float32).reshape(1, C)

    per_step = ((4 * T + 4) * Wp2 * C + K * K * C * C) * esize \
        + T * Wo * C * (osize + 12)
    vmem_limit = int(min(48 << 20, max(16 << 20, 6 * per_step)))

    out = pl.pallas_call(
        functools.partial(_conv_kernel, T=T, Wo=Wo),
        out_shape=jax.ShapeDtypeStruct((B, Ho, Wo, C), out_dtype),
        grid=(B, n_tiles),
        in_specs=[
            pl.BlockSpec((1, 4, T, Wp2, C), lambda b, t: (b, 0, t, 0, 0)),
            pl.BlockSpec((1, 4, 1, Wp2, C), lambda b, t: (b, 0, t, 0, 0)),
            pl.BlockSpec((K, K, C, C), lambda b, t: (0, 0, 0, 0)),
            pl.BlockSpec((1, C), lambda b, t: (0, 0)),
        ],
        out_specs=pl.BlockSpec((1, T, Wo, C), lambda b, t: (b, t, 0, 0)),
        compiler_params=pltpu.CompilerParams(
            dimension_semantics=("parallel", "parallel"),
            vmem_limit_bytes=vmem_limit),
    )(xs, bnd, w, b2)

    return jnp.transpose(out, (0, 3, 1, 2))    # back to NCHW


# --------------------- resample_with_conv=False (2x2 avg pool) ---------------

def _avgpool_kernel(x_ref, o_ref):
    # x_ref: (1, 4, T, Wo, C) parity planes; o_ref: (1, T, Wo, C)
    s = (x_ref[0, 0].astype(jnp.float32) + x_ref[0, 1].astype(jnp.float32)
         + x_ref[0, 2].astype(jnp.float32) + x_ref[0, 3].astype(jnp.float32))
    o_ref[0] = (s * 0.25).astype(o_ref.dtype)


def downsample_avgpool(x_nchw):
    """F.avg_pool2d(x, kernel_size=2, stride=2) on NCHW input."""
    B, C, H, W = x_nchw.shape
    Ho, Wo = H // 2, W // 2

    x = jnp.transpose(x_nchw, (0, 2, 3, 1))[:, :2 * Ho, :2 * Wo, :]   # NHWC
    xs = x.reshape(B, Ho, 2, Wo, 2, C).transpose(0, 2, 4, 1, 3, 5)
    xs = xs.reshape(B, 4, Ho, Wo, C)

    esize = jnp.dtype(x.dtype).itemsize
    per_row = Wo * C * (5 * esize + 8)
    T = _pick_row_tile(Ho, per_row)
    n_tiles = Ho // T
    vmem_limit = int(min(48 << 20, max(16 << 20, 6 * T * per_row)))

    out = pl.pallas_call(
        _avgpool_kernel,
        out_shape=jax.ShapeDtypeStruct((B, Ho, Wo, C), x.dtype),
        grid=(B, n_tiles),
        in_specs=[pl.BlockSpec((1, 4, T, Wo, C), lambda b, t: (b, 0, t, 0, 0))],
        out_specs=pl.BlockSpec((1, T, Wo, C), lambda b, t: (b, t, 0, 0)),
        compiler_params=pltpu.CompilerParams(
            dimension_semantics=("parallel", "parallel"),
            vmem_limit_bytes=vmem_limit),
    )(xs)

    return jnp.transpose(out, (0, 3, 1, 2))    # back to NCHW


if __name__ == "__main__":
    key = jax.random.PRNGKey(0)
    kw, kb, kx = jax.random.split(key, 3)

    B, C, H, W = 2, 4, 16, 16
    K = 3
    fan_in = C * K * K

    # kaiming_normal_(nonlinearity='linear'): std = 1 / sqrt(fan_in)
    weight_hwio = jax.random.normal(kw, (K, K, C, C), jnp.float32) / jnp.sqrt(
        jnp.float32(fan_in))
    # PyTorch Conv2d default bias init: U(-1/sqrt(fan_in), 1/sqrt(fan_in))
    bound = 1.0 / float(fan_in) ** 0.5
    bias = jax.random.uniform(kb, (C,), jnp.float32, -bound, bound)
    x = jax.random.normal(kx, (B, C, H, W), jnp.float32)

    # resample_with_conv=True branch (f32 and bf16-compute variants)
    y_conv = jax.block_until_ready(downsample_conv(x, weight_hwio, bias, K))
    y_conv_bf16 = jax.block_until_ready(
        downsample_conv(x, weight_hwio, bias, K, compute_dtype=jnp.bfloat16))
    # resample_with_conv=False branch
    y_pool = jax.block_until_ready(downsample_avgpool(x))

    # Reference checks (plain JAX)
    ref_conv = jax.lax.conv_general_dilated(
        jnp.transpose(x, (0, 2, 3, 1)), weight_hwio,
        window_strides=(2, 2), padding=((1, 1), (1, 1)),
        dimension_numbers=("NHWC", "HWIO", "NHWC")) + bias
    ref_conv = jnp.transpose(ref_conv, (0, 3, 1, 2))
    ref_pool = jnp.mean(x.reshape(B, C, H // 2, 2, W // 2, 2), axis=(3, 5))

    assert y_conv.shape == (B, C, H // 2, W // 2)
    assert y_pool.shape == (B, C, H // 2, W // 2)
    assert jnp.allclose(y_conv, ref_conv, atol=1e-4, rtol=1e-4)
    assert jnp.allclose(y_pool, ref_pool, atol=1e-5, rtol=1e-5)
    assert jnp.allclose(y_conv_bf16, ref_conv, atol=1e-1, rtol=1e-1)

    print("KERNEL_OK")
</pallas_src>

<mosaic_0001>
module attributes {stable_mosaic.version = 11 : i64} {
  func.func @_conv_kernel(%arg0: i32, %arg1: i32, %arg2: memref<1x4x4x9x4xf32, #tpu.memory_space<vmem>>, %arg3: memref<1x4x1x9x4xf32, #tpu.memory_space<vmem>>, %arg4: memref<3x3x4x4xf32, #tpu.memory_space<vmem>>, %arg5: memref<1x4xf32, #tpu.memory_space<vmem>>, %arg6: memref<1x4x8x4xf32, #tpu.memory_space<vmem>>) attributes {dimension_semantics = [#tpu.dimension_semantics<parallel>, #tpu.dimension_semantics<parallel>], iteration_bounds = array<i64: 2, 2>, scalar_prefetch = 0 : i64, scratch_operands = 0 : i64, tpu.core_type = #tpu.core_type<tc>, window_params = [{transform_indices = @transform_0, window_bounds = array<i64: 1, 4, 4, 9, 4>}, {transform_indices = @transform_1, window_bounds = array<i64: 1, 4, 1, 9, 4>}, {pipeline_mode = #tpu.pipeline_mode<synchronous>, transform_indices = @transform_2, window_bounds = array<i64: 3, 3, 4, 4>}, {pipeline_mode = #tpu.pipeline_mode<synchronous>, transform_indices = @transform_3, window_bounds = array<i64: 1, 4>}, {transform_indices = @transform_4, window_bounds = array<i64: 1, 4, 8, 4>}]} {
    %c0 = arith.constant 0 : index
    %c0_0 = arith.constant 0 : index
    %0 = vector.load %arg5[%c0, %c0_0] : memref<1x4xf32, #tpu.memory_space<vmem>>, vector<1x4xf32>
    %1 = vector.shape_cast %0 : vector<1x4xf32> to vector<1x4xf32>
    %2 = vector.broadcast %1 : vector<1x4xf32> to vector<32x4xf32>
    %c0_1 = arith.constant 0 : index
    %c0_2 = arith.constant 0 : index
    %c0_3 = arith.constant 0 : index
    %c0_4 = arith.constant 0 : index
    %c0_5 = arith.constant 0 : index
    %3 = vector.load %arg2[%c0_1, %c0_2, %c0_3, %c0_4, %c0_5] : memref<1x4x4x9x4xf32, #tpu.memory_space<vmem>>, vector<1x1x4x9x4xf32>
    %4 = vector.shape_cast %3 : vector<1x1x4x9x4xf32> to vector<4x9x4xf32>
    %c0_6 = arith.constant 0 : index
    %c1 = arith.constant 1 : index
    %c0_7 = arith.constant 0 : index
    %c0_8 = arith.constant 0 : index
    %c0_9 = arith.constant 0 : index
    %5 = vector.load %arg2[%c0_6, %c1, %c0_7, %c0_8, %c0_9] : memref<1x4x4x9x4xf32, #tpu.memory_space<vmem>>, vector<1x1x4x9x4xf32>
    %6 = vector.shape_cast %5 : vector<1x1x4x9x4xf32> to vector<4x9x4xf32>
    %7 = vector.extract_strided_slice %4 {offsets = [0, 0, 0], sizes = [4, 8, 4], strides = [1, 1, 1]} : vector<4x9x4xf32> to vector<4x8x4xf32>
    %8 = vector.shape_cast %7 : vector<4x8x4xf32> to vector<32x4xf32>
    %c0_10 = arith.constant 0 : index
    %c0_11 = arith.constant 0 : index
    %c0_12 = arith.constant 0 : index
    %c0_13 = arith.constant 0 : index
    %9 = vector.load %arg4[%c0_10, %c0_11, %c0_12, %c0_13] : memref<3x3x4x4xf32, #tpu.memory_space<vmem>>, vector<1x1x4x4xf32>
    %10 = vector.shape_cast %9 : vector<1x1x4x4xf32> to vector<4x4xf32>
    %cst = arith.constant dense<0.000000e+00> : vector<32x4xf32>
    %11 = tpu.matmul %8, %10, %cst {dimension_numbers = #tpu.dot_dimension_numbers<[1], [0], [0], [1], [0, 0, 1, 1], [], []>} : vector<32x4xf32>, vector<4x4xf32>, vector<32x4xf32> -> vector<32x4xf32>
    %12 = arith.addf %2, %11 : vector<32x4xf32>
    %13 = vector.extract_strided_slice %6 {offsets = [0, 0, 0], sizes = [4, 8, 4], strides = [1, 1, 1]} : vector<4x9x4xf32> to vector<4x8x4xf32>
    %14 = vector.shape_cast %13 : vector<4x8x4xf32> to vector<32x4xf32>
    %c0_14 = arith.constant 0 : index
    %c1_15 = arith.constant 1 : index
    %c0_16 = arith.constant 0 : index
    %c0_17 = arith.constant 0 : index
    %15 = vector.load %arg4[%c0_14, %c1_15, %c0_16, %c0_17] : memref<3x3x4x4xf32, #tpu.memory_space<vmem>>, vector<1x1x4x4xf32>
    %16 = vector.shape_cast %15 : vector<1x1x4x4xf32> to vector<4x4xf32>
    %cst_18 = arith.constant dense<0.000000e+00> : vector<32x4xf32>
    %17 = tpu.matmul %14, %16, %cst_18 {dimension_numbers = #tpu.dot_dimension_numbers<[1], [0], [0], [1], [0, 0, 1, 1], [], []>} : vector<32x4xf32>, vector<4x4xf32>, vector<32x4xf32> -> vector<32x4xf32>
    %18 = arith.addf %12, %17 : vector<32x4xf32>
    %19 = vector.extract_strided_slice %4 {offsets = [0, 1, 0], sizes = [4, 8, 4], strides = [1, 1, 1]} : vector<4x9x4xf32> to vector<4x8x4xf32>
    %20 = vector.shape_cast %19 : vector<4x8x4xf32> to vector<32x4xf32>
    %c0_19 = arith.constant 0 : index
    %c2 = arith.constant 2 : index
    %c0_20 = arith.constant 0 : index
    %c0_21 = arith.constant 0 : index
    %21 = vector.load %arg4[%c0_19, %c2, %c0_20, %c0_21] : memref<3x3x4x4xf32, #tpu.memory_space<vmem>>, vector<1x1x4x4xf32>
    %22 = vector.shape_cast %21 : vector<1x1x4x4xf32> to vector<4x4xf32>
    %cst_22 = arith.constant dense<0.000000e+00> : vector<32x4xf32>
    %23 = tpu.matmul %20, %22, %cst_22 {dimension_numbers = #tpu.dot_dimension_numbers<[1], [0], [0], [1], [0, 0, 1, 1], [], []>} : vector<32x4xf32>, vector<4x4xf32>, vector<32x4xf32> -> vector<32x4xf32>
    %24 = arith.addf %18, %23 : vector<32x4xf32>
    %c0_23 = arith.constant 0 : index
    %c2_24 = arith.constant 2 : index
    %c0_25 = arith.constant 0 : index
    %c0_26 = arith.constant 0 : index
    %c0_27 = arith.constant 0 : index
    %25 = vector.load %arg2[%c0_23, %c2_24, %c0_25, %c0_26, %c0_27] : memref<1x4x4x9x4xf32, #tpu.memory_space<vmem>>, vector<1x1x4x9x4xf32>
    %26 = vector.shape_cast %25 : vector<1x1x4x9x4xf32> to vector<4x9x4xf32>
    %c0_28 = arith.constant 0 : index
    %c3 = arith.constant 3 : index
    %c0_29 = arith.constant 0 : index
    %c0_30 = arith.constant 0 : index
    %c0_31 = arith.constant 0 : index
    %27 = vector.load %arg2[%c0_28, %c3, %c0_29, %c0_30, %c0_31] : memref<1x4x4x9x4xf32, #tpu.memory_space<vmem>>, vector<1x1x4x9x4xf32>
    %28 = vector.shape_cast %27 : vector<1x1x4x9x4xf32> to vector<4x9x4xf32>
    %29 = vector.extract_strided_slice %26 {offsets = [0, 0, 0], sizes = [4, 8, 4], strides = [1, 1, 1]} : vector<4x9x4xf32> to vector<4x8x4xf32>
    %30 = vector.shape_cast %29 : vector<4x8x4xf32> to vector<32x4xf32>
    %c1_32 = arith.constant 1 : index
    %c0_33 = arith.constant 0 : index
    %c0_34 = arith.constant 0 : index
    %c0_35 = arith.constant 0 : index
    %31 = vector.load %arg4[%c1_32, %c0_33, %c0_34, %c0_35] : memref<3x3x4x4xf32, #tpu.memory_space<vmem>>, vector<1x1x4x4xf32>
    %32 = vector.shape_cast %31 : vector<1x1x4x4xf32> to vector<4x4xf32>
    %cst_36 = arith.constant dense<0.000000e+00> : vector<32x4xf32>
    %33 = tpu.matmul %30, %32, %cst_36 {dimension_numbers = #tpu.dot_dimension_numbers<[1], [0], [0], [1], [0, 0, 1, 1], [], []>} : vector<32x4xf32>, vector<4x4xf32>, vector<32x4xf32> -> vector<32x4xf32>
    %34 = arith.addf %24, %33 : vector<32x4xf32>
    %35 = vector.extract_strided_slice %28 {offsets = [0, 0, 0], sizes = [4, 8, 4], strides = [1, 1, 1]} : vector<4x9x4xf32> to vector<4x8x4xf32>
    %36 = vector.shape_cast %35 : vector<4x8x4xf32> to vector<32x4xf32>
    %c1_37 = arith.constant 1 : index
    %c1_38 = arith.constant 1 : index
    %c0_39 = arith.constant 0 : index
    %c0_40 = arith.constant 0 : index
    %37 = vector.load %arg4[%c1_37, %c1_38, %c0_39, %c0_40] : memref<3x3x4x4xf32, #tpu.memory_space<vmem>>, vector<1x1x4x4xf32>
    %38 = vector.shape_cast %37 : vector<1x1x4x4xf32> to vector<4x4xf32>
    %cst_41 = arith.constant dense<0.000000e+00> : vector<32x4xf32>
    %39 = tpu.matmul %36, %38, %cst_41 {dimension_numbers = #tpu.dot_dimension_numbers<[1], [0], [0], [1], [0, 0, 1, 1], [], []>} : vector<32x4xf32>, vector<4x4xf32>, vector<32x4xf32> -> vector<32x4xf32>
    %40 = arith.addf %34, %39 : vector<32x4xf32>
    %41 = vector.extract_strided_slice %26 {offsets = [0, 1, 0], sizes = [4, 8, 4], strides = [1, 1, 1]} : vector<4x9x4xf32> to vector<4x8x4xf32>
    %42 = vector.shape_cast %41 : vector<4x8x4xf32> to vector<32x4xf32>
    %c1_42 = arith.constant 1 : index
    %c2_43 = arith.constant 2 : index
    %c0_44 = arith.constant 0 : index
    %c0_45 = arith.constant 0 : index
    %43 = vector.load %arg4[%c1_42, %c2_43, %c0_44, %c0_45] : memref<3x3x4x4xf32, #tpu.memory_space<vmem>>, vector<1x1x4x4xf32>
    %44 = vector.shape_cast %43 : vector<1x1x4x4xf32> to vector<4x4xf32>
    %cst_46 = arith.constant dense<0.000000e+00> : vector<32x4xf32>
    %45 = tpu.matmul %42, %44, %cst_46 {dimension_numbers = #tpu.dot_dimension_numbers<[1], [0], [0], [1], [0, 0, 1, 1], [], []>} : vector<32x4xf32>, vector<4x4xf32>, vector<32x4xf32> -> vector<32x4xf32>
    %46 = arith.addf %40, %45 : vector<32x4xf32>
    %c0_47 = arith.constant 0 : index
    %c0_48 = arith.constant 0 : index
    %c1_49 = arith.constant 1 : index
    %c0_50 = arith.constant 0 : index
    %c0_51 = arith.constant 0 : index
    %47 = vector.load %arg2[%c0_47, %c0_48, %c1_49, %c0_50, %c0_51] : memref<1x4x4x9x4xf32, #tpu.memory_space<vmem>>, vector<1x1x3x9x4xf32>
    %48 = vector.shape_cast %47 : vector<1x1x3x9x4xf32> to vector<3x9x4xf32>
    %c0_52 = arith.constant 0 : index
    %c0_53 = arith.constant 0 : index
    %c0_54 = arith.constant 0 : index
    %c0_55 = arith.constant 0 : index
    %c0_56 = arith.constant 0 : index
    %49 = vector.load %arg3[%c0_52, %c0_53, %c0_54, %c0_55, %c0_56] : memref<1x4x1x9x4xf32, #tpu.memory_space<vmem>>, vector<1x1x1x9x4xf32>
    %50 = vector.shape_cast %49 : vector<1x1x1x9x4xf32> to vector<1x9x4xf32>
    %51 = tpu.concatenate %48, %50 in 0 : vector<3x9x4xf32>, vector<1x9x4xf32> -> vector<4x9x4xf32>
    %c0_57 = arith.constant 0 : index
    %c1_58 = arith.constant 1 : index
    %c1_59 = arith.constant 1 : index
    %c0_60 = arith.constant 0 : index
    %c0_61 = arith.constant 0 : index
    %52 = vector.load %arg2[%c0_57, %c1_58, %c1_59, %c0_60, %c0_61] : memref<1x4x4x9x4xf32, #tpu.memory_space<vmem>>, vector<1x1x3x9x4xf32>
    %53 = vector.shape_cast %52 : vector<1x1x3x9x4xf32> to vector<3x9x4xf32>
    %c0_62 = arith.constant 0 : index
    %c1_63 = arith.constant 1 : index
    %c0_64 = arith.constant 0 : index
    %c0_65 = arith.constant 0 : index
    %c0_66 = arith.constant 0 : index
    %54 = vector.load %arg3[%c0_62, %c1_63, %c0_64, %c0_65, %c0_66] : memref<1x4x1x9x4xf32, #tpu.memory_space<vmem>>, vector<1x1x1x9x4xf32>
    %55 = vector.shape_cast %54 : vector<1x1x1x9x4xf32> to vector<1x9x4xf32>
    %56 = tpu.concatenate %53, %55 in 0 : vector<3x9x4xf32>, vector<1x9x4xf32> -> vector<4x9x4xf32>
    %57 = vector.extract_strided_slice %51 {offsets = [0, 0, 0], sizes = [4, 8, 4], strides = [1, 1, 1]} : vector<4x9x4xf32> to vector<4x8x4xf32>
    %58 = vector.shape_cast %57 : vector<4x8x4xf32> to vector<32x4xf32>
    %c2_67 = arith.constant 2 : index
    %c0_68 = arith.constant 0 : index
    %c0_69 = arith.constant 0 : index
    %c0_70 = arith.constant 0 : index
    %59 = vector.load %arg4[%c2_67, %c0_68, %c0_69, %c0_70] : memref<3x3x4x4xf32, #tpu.memory_space<vmem>>, vector<1x1x4x4xf32>
    %60 = vector.shape_cast %59 : vector<1x1x4x4xf32> to vector<4x4xf32>
    %cst_71 = arith.constant dense<0.000000e+00> : vector<32x4xf32>
    %61 = tpu.matmul %58, %60, %cst_71 {dimension_numbers = #tpu.dot_dimension_numbers<[1], [0], [0], [1], [0, 0, 1, 1], [], []>} : vector<32x4xf32>, vector<4x4xf32>, vector<32x4xf32> -> vector<32x4xf32>
    %62 = arith.addf %46, %61 : vector<32x4xf32>
    %63 = vector.extract_strided_slice %56 {offsets = [0, 0, 0], sizes = [4, 8, 4], strides = [1, 1, 1]} : vector<4x9x4xf32> to vector<4x8x4xf32>
    %64 = vector.shape_cast %63 : vector<4x8x4xf32> to vector<32x4xf32>
    %c2_72 = arith.constant 2 : index
    %c1_73 = arith.constant 1 : index
    %c0_74 = arith.constant 0 : index
    %c0_75 = arith.constant 0 : index
    %65 = vector.load %arg4[%c2_72, %c1_73, %c0_74, %c0_75] : memref<3x3x4x4xf32, #tpu.memory_space<vmem>>, vector<1x1x4x4xf32>
    %66 = vector.shape_cast %65 : vector<1x1x4x4xf32> to vector<4x4xf32>
    %cst_76 = arith.constant dense<0.000000e+00> : vector<32x4xf32>
    %67 = tpu.matmul %64, %66, %cst_76 {dimension_numbers = #tpu.dot_dimension_numbers<[1], [0], [0], [1], [0, 0, 1, 1], [], []>} : vector<32x4xf32>, vector<4x4xf32>, vector<32x4xf32> -> vector<32x4xf32>
    %68 = arith.addf %62, %67 : vector<32x4xf32>
    %69 = vector.extract_strided_slice %51 {offsets = [0, 1, 0], sizes = [4, 8, 4], strides = [1, 1, 1]} : vector<4x9x4xf32> to vector<4x8x4xf32>
    %70 = vector.shape_cast %69 : vector<4x8x4xf32> to vector<32x4xf32>
    %c2_77 = arith.constant 2 : index
    %c2_78 = arith.constant 2 : index
    %c0_79 = arith.constant 0 : index
    %c0_80 = arith.constant 0 : index
    %71 = vector.load %arg4[%c2_77, %c2_78, %c0_79, %c0_80] : memref<3x3x4x4xf32, #tpu.memory_space<vmem>>, vector<1x1x4x4xf32>
    %72 = vector.shape_cast %71 : vector<1x1x4x4xf32> to vector<4x4xf32>
    %cst_81 = arith.constant dense<0.000000e+00> : vector<32x4xf32>
    %73 = tpu.matmul %70, %72, %cst_81 {dimension_numbers = #tpu.dot_dimension_numbers<[1], [0], [0], [1], [0, 0, 1, 1], [], []>} : vector<32x4xf32>, vector<4x4xf32>, vector<32x4xf32> -> vector<32x4xf32>
    %74 = arith.addf %68, %73 : vector<32x4xf32>
    %75 = vector.shape_cast %74 : vector<32x4xf32> to vector<4x8x4xf32>
    %c0_82 = arith.constant 0 : index
    %c0_83 = arith.constant 0 : index
    %c0_84 = arith.constant 0 : index
    %c0_85 = arith.constant 0 : index
    %76 = vector.load %arg6[%c0_82, %c0_83, %c0_84, %c0_85] : memref<1x4x8x4xf32, #tpu.memory_space<vmem>>, vector<1x4x8x4xf32>
    %77 = vector.shape_cast %76 : vector<1x4x8x4xf32> to vector<4x8x4xf32>
    %78 = vector.shape_cast %75 : vector<4x8x4xf32> to vector<1x4x8x4xf32>
    tpu.vector_store %arg6[%c0_82, %c0_83, %c0_84, %c0_85], %78 {strides = array<i32>} : memref<1x4x8x4xf32, #tpu.memory_space<vmem>>, vector<1x4x8x4xf32>,
    return
  }
  func.func @transform_0(%arg0: i32, %arg1: i32) -> (i32, i32, i32, i32, i32) {
    %c0_i32 = arith.constant 0 : i32
    %c0_i32_0 = arith.constant 0 : i32
    %c0_i32_1 = arith.constant 0 : i32
    %c0_i32_2 = arith.constant 0 : i32
    return %arg0, %c0_i32, %arg1, %c0_i32_0, %c0_i32_1 : i32, i32, i32, i32, i32
  }
  func.func @transform_1(%arg0: i32, %arg1: i32) -> (i32, i32, i32, i32, i32) {
    %c0_i32 = arith.constant 0 : i32
    %c0_i32_0 = arith.constant 0 : i32
    %c0_i32_1 = arith.constant 0 : i32
    %c0_i32_2 = arith.constant 0 : i32
    return %arg0, %c0_i32, %arg1, %c0_i32_0, %c0_i32_1 : i32, i32, i32, i32, i32
  }
  func.func @transform_2(%arg0: i32, %arg1: i32) -> (i32, i32, i32, i32) {
    %c0_i32 = arith.constant 0 : i32
    %c0_i32_0 = arith.constant 0 : i32
    %c0_i32_1 = arith.constant 0 : i32
    %c0_i32_2 = arith.constant 0 : i32
    %c0_i32_3 = arith.constant 0 : i32
    return %c0_i32, %c0_i32_0, %c0_i32_1, %c0_i32_2 : i32, i32, i32, i32
  }
  func.func @transform_3(%arg0: i32, %arg1: i32) -> (i32, i32) {
    %c0_i32 = arith.constant 0 : i32
    %c0_i32_0 = arith.constant 0 : i32
    %c0_i32_1 = arith.constant 0 : i32
    return %c0_i32, %c0_i32_0 : i32, i32
  }
  func.func @transform_4(%arg0: i32, %arg1: i32) -> (i32, i32, i32, i32) {
    %c0_i32 = arith.constant 0 : i32
    %c0_i32_0 = arith.constant 0 : i32
    %c0_i32_1 = arith.constant 0 : i32
    return %arg0, %arg1, %c0_i32, %c0_i32_0 : i32, i32, i32, i32
  }
}

</mosaic_0001>

<llo_original>
// kernel: tpu_custom_call.1
$region0: #{tpu_custom_call.1}
  #allocation0 [shape = 'u32[]', space=smem, size = 0x4, offset = 0x4, fixed_abs, tag = 'smem constant byte address 0x4 - core index']
  #allocation1 [shape = 'u32[144,128]{1,0:T(1,128)}', space=vmem, size = 0x12000, scoped, tag = 'internal scratch']
  %s0 = inlined_call_operand.vmem [shape: f32[2,4,9,9,4], index: 0, kind: input, shape index: {}]
  %s1 = inlined_call_operand.vmem [shape: f32[2,4,2,9,4], index: 1, kind: input, shape index: {}]
  %s2 = inlined_call_operand.vmem [shape: f32[3,3,4,4], index: 2, kind: input, shape index: {}]
  %s3 = inlined_call_operand.vmem [shape: f32[1,4], index: 3, kind: input, shape index: {}]
  %s4 = inlined_call_operand.vmem [shape: f32[2,8,8,4], index: 4, kind: output, shape index: {}]
  %s5 = sld [smem:[#allocation0]]
  $region139: #{tpu_custom_call.1} parent=0
    _
  %s7 = ssub.s32 1, %s5
  %s8 = scalar_select 0, %s7, %s5
  $region1: #{tpu_custom_call.1} parent=0
    #allocation2 [shape = 'u8[262144]{0}', space=vmem, size = 0x40000, scoped, tag = 'input window, operand 0']
    #allocation3 [shape = 'u8[65536]{0}', space=vmem, size = 0x10000, scoped, tag = 'input window, operand 1']
    loop: start=0, step=1, limit=6
    $region2: #{tpu_custom_call.1} parent=1 // loop_pre_header
      _
    $region3: #{tpu_custom_call.1} parent=1 // loop_header
      %s10 = sphi 0, %s14
      %p11 = scmp.ge.s32.totalorder %s10, 6
      %s17 = sphi 0, %s29
      %s18 = sphi 0, %s25
      %s19 = sphi 0, %s17
      %s20 = sphi 0, %s18
      %s21 = sphi 0, %s19
      %s22 = sphi 0, %s20
      %s34 = sphi 0, %s36
      %s37 = sphi 0, %s34
      %s38 = sphi 0, %s37
      %s54 = sphi 0, %s38
      %s62 = sphi 0, %s64
      %s65 = sphi 0, %s62
      %s66 = sphi 0, %s65
      %s82 = sphi 0, %s66
      %s86 = sphi 0, %s86
      %s88 = sphi 0, %s86
      %s89 = sphi 0, %s88
      %s103 = sphi 0, %s89
      %s107 = sphi 0, %s107
      %s109 = sphi 0, %s107
      %s110 = sphi 0, %s109
      %s124 = sphi 0, %s110
      %s132 = sphi 0, %s134
      %s135 = sphi 0, %s132
      %s136 = sphi 0, %s135
      %s152 = sphi 0, %s136
    $region4: #{tpu_custom_call.1} parent=1 // loop_header_branch
      %13 = sbr.rel (%p11) target = $region8
    $region5: #{tpu_custom_call.1} parent=1 // loop_body
      %s15 = ssub.s32 %s10, 1
      %s16 = ssub.s32 %s10, 2
      %s23 = sadd.s32 1, %s18
      %p24 = scmp.ge.s32.totalorder %s23, 2
      %s25 = scalar_select %p24, 0, %s23
      %s26 = sadd.s32 1, %s17
      %s27 = scalar_select %p24, %s26, %s17
      %p28 = scmp.ge.s32.totalorder %s27, 2
      %s29 = scalar_select %p28, 0, %s27
      %s30 = ssub.s32 %s17, %s29
      %s31 = ssub.s32 %s18, %s25
      %s32 = sor.u32 %s30, %s31
      %p33 = scmp.eq.s32.totalorder %s32, 0
      %s35 = sadd.s32 %s34, 1
      %s36 = scalar_select %p33, %s34, %s35
      %p39 = pneg %p33
      %p40 = scmp.eq.s32.totalorder %s10, 3
      %p41 = por %p39, %p40
      %p42 = scmp.ne.s32.totalorder %s34, %s37
      %p43 = scmp.eq.s32.totalorder %s10, 0
      %p44 = por %p42, %p43
      %p45 = scmp.ne.s32.totalorder %s34, %s37
      %p46 = scmp.eq.s32.totalorder %s15, 3
      %p47 = por %p45, %p46
      %p48 = scmp.ne.s32.totalorder %s37, %s38
      %p49 = scmp.eq.s32.totalorder %s15, 0
      %p50 = por %p48, %p49
      %p51 = scmp.ne.s32.totalorder %s37, %s38
      %p52 = scmp.eq.s32.totalorder %s16, 3
      %p53 = por %p51, %p52
      %p55 = scmp.ne.s32.totalorder %s38, %s54
      %p56 = scmp.eq.s32.totalorder %s16, 0
      %p57 = por %p55, %p56
      %s58 = ssub.s32 %s17, %s29
      %s59 = ssub.s32 %s18, %s25
      %s60 = sor.u32 %s58, %s59
      %p61 = scmp.eq.s32.totalorder %s60, 0
      %s63 = sadd.s32 %s62, 1
      %s64 = scalar_select %p61, %s62, %s63
      %p67 = pneg %p61
      %p68 = scmp.eq.s32.totalorder %s10, 3
      %p69 = por %p67, %p68
      %p70 = scmp.ne.s32.totalorder %s62, %s65
      %p71 = scmp.eq.s32.totalorder %s10, 0
      %p72 = por %p70, %p71
      %p73 = scmp.ne.s32.totalorder %s62, %s65
      %p74 = scmp.eq.s32.totalorder %s15, 3
      %p75 = por %p73, %p74
      %p76 = scmp.ne.s32.totalorder %s65, %s66
      %p77 = scmp.eq.s32.totalorder %s15, 0
      %p78 = por %p76, %p77
      %p79 = scmp.ne.s32.totalorder %s65, %s66
      %p80 = scmp.eq.s32.totalorder %s16, 3
      %p81 = por %p79, %p80
      %p83 = scmp.ne.s32.totalorder %s66, %s82
      %p84 = scmp.eq.s32.totalorder %s16, 0
      %p85 = por %p83, %p84
      %s87 = sadd.s32 %s86, 1
      %p90 = scmp.eq.s32.totalorder %s10, 3
      %p91 = scmp.ne.s32.totalorder %s86, %s88
      %p92 = scmp.eq.s32.totalorder %s10, 0
      %p93 = por %p91, %p92
      %p94 = scmp.ne.s32.totalorder %s86, %s88
      %p95 = scmp.eq.s32.totalorder %s15, 3
      %p96 = por %p94, %p95
      %p97 = scmp.ne.s32.totalorder %s88, %s89
      %p98 = scmp.eq.s32.totalorder %s15, 0
      %p99 = por %p97, %p98
      %p100 = scmp.ne.s32.totalorder %s88, %s89
      %p101 = scmp.eq.s32.totalorder %s16, 3
      %p102 = por %p100, %p101
      %p104 = scmp.ne.s32.totalorder %s89, %s103
      %p105 = scmp.eq.s32.totalorder %s16, 0
      %p106 = por %p104, %p105
      %s108 = sadd.s32 %s107, 1
      %p111 = scmp.eq.s32.totalorder %s10, 3
      %p112 = scmp.ne.s32.totalorder %s107, %s109
      %p113 = scmp.eq.s32.totalorder %s10, 0
      %p114 = por %p112, %p113
      %p115 = scmp.ne.s32.totalorder %s107, %s109
      %p116 = scmp.eq.s32.totalorder %s15, 3
      %p117 = por %p115, %p116
      %p118 = scmp.ne.s32.totalorder %s109, %s110
      %p119 = scmp.eq.s32.totalorder %s15, 0
      %p120 = por %p118, %p119
      %p121 = scmp.ne.s32.totalorder %s109, %s110
      %p122 = scmp.eq.s32.totalorder %s16, 3
      %p123 = por %p121, %p122
      %p125 = scmp.ne.s32.totalorder %s110, %s124
      %p126 = scmp.eq.s32.totalorder %s16, 0
      %p127 = por %p125, %p126
      %s128 = ssub.s32 %s17, %s29
      %s129 = ssub.s32 %s18, %s25
      %s130 = sor.u32 %s128, %s129
      %p131 = scmp.eq.s32.totalorder %s130, 0
      %s133 = sadd.s32 %s132, 1
      %s134 = scalar_select %p131, %s132, %s133
      %p137 = pneg %p131
      %p138 = scmp.eq.s32.totalorder %s10, 3
      %p139 = por %p137, %p138
      %p140 = scmp.ne.s32.totalorder %s132, %s135
      %p141 = scmp.eq.s32.totalorder %s10, 0
      %p142 = por %p140, %p141
      %p143 = scmp.ne.s32.totalorder %s132, %s135
      %p144 = scmp.eq.s32.totalorder %s15, 3
      %p145 = por %p143, %p144
      %p146 = scmp.ne.s32.totalorder %s135, %s136
      %p147 = scmp.eq.s32.totalorder %s15, 0
      %p148 = por %p146, %p147
      %p149 = scmp.ne.s32.totalorder %s135, %s136
      %p150 = scmp.eq.s32.totalorder %s16, 3
      %p151 = por %p149, %p150
      %p153 = scmp.ne.s32.totalorder %s136, %s152
      %p154 = scmp.eq.s32.totalorder %s16, 0
      %p155 = por %p153, %p154
      %p156 = scmp.le.s32.totalorder 1, %s10
      %p157 = scmp.lt.s32.totalorder %s10, 5
      %p158 = pnand %p156, %p157
      %p159 = pneg %p158
      // Predicated region
      $region9: #{tpu_custom_call.1} parent=5 // pred_check
        _
      $region10: #{tpu_custom_call.1} parent=5 // pred_check_branch
        %161 = sbr.rel (%p158) target = $region12
      $region11: #{tpu_custom_call.1} parent=5 // pred_region
        %s162 = ssub.s32 %s10, 1
        // Predicated region
        $region13: #{tpu_custom_call.1} parent=11 // pred_check
          %p163 = pneg %p99
        $region14: #{tpu_custom_call.1} parent=11 // pred_check_branch
          %165 = sbr.rel (%p163) target = $region16
        $region15: #{tpu_custom_call.1} parent=11 // pred_region
          _
        $region16: #{tpu_custom_call.1} parent=11 // pred_fallthru
          _
        // Predicated region
        $region17: #{tpu_custom_call.1} parent=11 // pred_check
          %p166 = pneg %p120
        $region18: #{tpu_custom_call.1} parent=11 // pred_check_branch
          %168 = sbr.rel (%p166) target = $region20
        $region19: #{tpu_custom_call.1} parent=11 // pred_region
          _
        $region20: #{tpu_custom_call.1} parent=11 // pred_fallthru
          _
      $region12: #{tpu_custom_call.1} parent=5 // pred_fallthru
        _
      %p169 = scmp.lt.s32.totalorder %s10, 4
      // Predicated region
      $region21: #{tpu_custom_call.1} parent=5 // pred_check
        %p170 = pneg %p169
      $region22: #{tpu_custom_call.1} parent=5 // pred_check_branch
        %172 = sbr.rel (%p170) target = $region24
      $region23: #{tpu_custom_call.1} parent=5 // pred_region
        // Predicated region
        $region25: #{tpu_custom_call.1} parent=23 // pred_check
          %p173 = pneg %p44
        $region26: #{tpu_custom_call.1} parent=23 // pred_check_branch
          %175 = sbr.rel (%p173) target = $region28
        $region27: #{tpu_custom_call.1} parent=23 // pred_region
          %s176 = sand.u32 %s34, 1
          %s177 = sand.u32 %s34, 1
          %s178 = smul.addr %s177, 256
          %s179 = scalar_lea.vmem [#allocation2], %s178
          %s180 = smul.u32 4, %s18
          %s181 = ssub.s32 9, %s180
          %p182 = scmp.lt.s32.totalorder %s181, 4
          %s183 = scalar_select %p182, %s181, 4
          %s184 = smul.u32 512, %s183
          %s185 = smul.u32 %s184, 2
          %p186 = scmp.ne.s32.totalorder 0, %s185
          %s187 = smul.addr %s180, 2
          %s188 = smul.addr %s17, 72
          %s189 = sadd.s32 %s187, %s188
          %s190 = smul.addr %s189, 8
          %s191 = scalar_lea.vmem %s0, %s190
          %s192 = smul.u32 %s183, 2
          // Predicated region
          $region29: #{tpu_custom_call.1} parent=27 // pred_check
            %p193 = pneg %p186
          $region30: #{tpu_custom_call.1} parent=27 // pred_check_branch
            %195 = sbr.rel (%p193) target = $region32
          $region31: #{tpu_custom_call.1} parent=27 // pred_region
            // Predicated region
            $region33: #{tpu_custom_call.1} parent=31 // pred_check
              _
            $region34: #{tpu_custom_call.1} parent=31 // pred_check_branch
              %197 = sbr.rel (0) target = $region36
            $region35: #{tpu_custom_call.1} parent=31 // pred_region
              // Predicated region
              $region55: #{tpu_custom_call.1} parent=35 // pred_check
                _
              $region56: #{tpu_custom_call.1} parent=35 // pred_check_branch
                %315 = sbr.rel (0) target = $region58
              $region57: #{tpu_custom_call.1} parent=35 // pred_region
                %s316 = sshrl.u32 %s192, 3
                // While loop
                $region59: #{tpu_custom_call.1} parent=57 // loop_pre_header
                  _
                $region60: #{tpu_custom_call.1} parent=57 // loop_header
                  %s318 = sphi 0, %s320
                  %p319 = scmp.ge.s32.totalorder %s318, %s316
                  %s323 = sphi 0, %s392
                  %s324 = sphi %s191, %s395
                  %s325 = sphi %s179, %s396
                $region61: #{tpu_custom_call.1} parent=57 // loop_header_branch
                  %322 = sbr.rel (%p319) target = $region65
                $region62: #{tpu_custom_call.1} parent=57 // loop_body
                  %v326 = vld [vmem:[%s324] sm:$0xff]
                  %327 = vst [vmem:[%s325] sm:$0xff] %v326
                  %v328 = vld [vmem:[%s324 + $0x8] sm:$0xff]
                  %329 = vst [vmem:[%s325 + $0x8] sm:$0xff] %v328
                  %v330 = vld [vmem:[%s324 + $0x10] sm:$0xff]
                  %331 = vst [vmem:[%s325 + $0x10] sm:$0xff] %v330
                  %v332 = vld [vmem:[%s324 + $0x18] sm:$0xff]
                  %333 = vst [vmem:[%s325 + $0x18] sm:$0xff] %v332
                  %v334 = vld [vmem:[%s324 + $0x20] sm:$0xff]
                  %335 = vst [vmem:[%s325 + $0x20] sm:$0xff] %v334
                  %v336 = vld [vmem:[%s324 + $0x28] sm:$0xff]
                  %337 = vst [vmem:[%s325 + $0x28] sm:$0xff] %v336
                  %v338 = vld [vmem:[%s324 + $0x30] sm:$0xff]
                  %339 = vst [vmem:[%s325 + $0x30] sm:$0xff] %v338
                  %v340 = vld [vmem:[%s324 + $0x38] sm:$0xff]
                  %341 = vst [vmem:[%s325 + $0x38] sm:$0xff] %v340
                  %v342 = vld [vmem:[%s324 + $0x90] sm:$0xff]
                  %343 = vst [vmem:[%s325 + $0x40] sm:$0xff] %v342
                  %v344 = vld [vmem:[%s324 + $0x98] sm:$0xff]
                  %345 = vst [vmem:[%s325 + $0x48] sm:$0xff] %v344
                  %v346 = vld [vmem:[%s324 + $0xa0] sm:$0xff]
                  %347 = vst [vmem:[%s325 + $0x50] sm:$0xff] %v346
                  %v348 = vld [vmem:[%s324 + $0xa8] sm:$0xff]
                  %349 = vst [vmem:[%s325 + $0x58] sm:$0xff] %v348
                  %v350 = vld [vmem:[%s324 + $0xb0] sm:$0xff]
                  %351 = vst [vmem:[%s325 + $0x60] sm:$0xff] %v350
                  %v352 = vld [vmem:[%s324 + $0xb8] sm:$0xff]
                  %353 = vst [vmem:[%s325 + $0x68] sm:$0xff] %v352
                  %v354 = vld [vmem:[%s324 + $0xc0] sm:$0xff]
                  %355 = vst [vmem:[%s325 + $0x70] sm:$0xff] %v354
                  %v356 = vld [vmem:[%s324 + $0xc8] sm:$0xff]
                  %357 = vst [vmem:[%s325 + $0x78] sm:$0xff] %v356
                  %v358 = vld [vmem:[%s324 + $0x120] sm:$0xff]
                  %359 = vst [vmem:[%s325 + $0x80] sm:$0xff] %v358
                  %v360 = vld [vmem:[%s324 + $0x128] sm:$0xff]
                  %361 = vst [vmem:[%s325 + $0x88] sm:$0xff] %v360
                  %v362 = vld [vmem:[%s324 + $0x130] sm:$0xff]
                  %363 = vst [vmem:[%s325 + $0x90] sm:$0xff] %v362
                  %v364 = vld [vmem:[%s324 + $0x138] sm:$0xff]
                  %365 = vst [vmem:[%s325 + $0x98] sm:$0xff] %v364
                  %v366 = vld [vmem:[%s324 + $0x140] sm:$0xff]
                  %367 = vst [vmem:[%s325 + $0xa0] sm:$0xff] %v366
                  %v368 = vld [vmem:[%s324 + $0x148] sm:$0xff]
                  %369 = vst [vmem:[%s325 + $0xa8] sm:$0xff] %v368
                  %v370 = vld [vmem:[%s324 + $0x150] sm:$0xff]
                  %371 = vst [vmem:[%s325 + $0xb0] sm:$0xff] %v370
                  %v372 = vld [vmem:[%s324 + $0x158] sm:$0xff]
                  %373 = vst [vmem:[%s325 + $0xb8] sm:$0xff] %v372
                  %v374 = vld [vmem:[%s324 + $0x1b0] sm:$0xff]
                  %375 = vst [vmem:[%s325 + $0xc0] sm:$0xff] %v374
                  %v376 = vld [vmem:[%s324 + $0x1b8] sm:$0xff]
                  %377 = vst [vmem:[%s325 + $0xc8] sm:$0xff] %v376
                  %v378 = vld [vmem:[%s324 + $0x1c0] sm:$0xff]
                  %379 = vst [vmem:[%s325 + $0xd0] sm:$0xff] %v378
                  %v380 = vld [vmem:[%s324 + $0x1c8] sm:$0xff]
                  %381 = vst [vmem:[%s325 + $0xd8] sm:$0xff] %v380
                  %v382 = vld [vmem:[%s324 + $0x1d0] sm:$0xff]
                  %383 = vst [vmem:[%s325 + $0xe0] sm:$0xff] %v382
                  %v384 = vld [vmem:[%s324 + $0x1d8] sm:$0xff]
                  %385 = vst [vmem:[%s325 + $0xe8] sm:$0xff] %v384
                  %v386 = vld [vmem:[%s324 + $0x1e0] sm:$0xff]
                  %387 = vst [vmem:[%s325 + $0xf0] sm:$0xff] %v386
                  %v388 = vld [vmem:[%s324 + $0x1e8] sm:$0xff]
                  %389 = vst [vmem:[%s325 + $0xf8] sm:$0xff] %v388
                  %s390 = sadd.s32 1, %s323
                  %p391 = scmp.ge.s32.totalorder %s390, %s316
                  %s392 = scalar_select %p391, 0, %s390
                  %s393 = smul.u32 %s392, 64
                  %s394 = smul.u32 %s392, 64
                  %s395 = scalar_lea.vmem %s191, %s393
                  %s396 = scalar_lea.vmem %s179, %s394 [#allocation2]
                $region63: #{tpu_custom_call.1} parent=57 // loop_footer
                  %s320 = sadd.s32 %s318, 1
                $region64: #{tpu_custom_call.1} parent=57 // loop_footer_branch
                  %317 = sbr.rel target = $region60
                $region65: #{tpu_custom_call.1} parent=57 // loop_exit
                  _
                %s397 = sshrl.u32 %s192, 3
                %s398 = sand.u32 %s192, 7
                %s399 = smul.u32 %s397, 8
                %s400 = smul.u32 8, %s399
                %s401 = scalar_lea.vmem %s191, %s400
                %s402 = smul.u32 8, %s399
                %s403 = scalar_lea.vmem %s179, %s402 [#allocation2]
                // While loop
                $region66: #{tpu_custom_call.1} parent=57 // loop_pre_header
                  _
                $region67: #{tpu_custom_call.1} parent=57 // loop_header
                  %s405 = sphi 0, %s407
                  %p406 = scmp.ge.s32.totalorder %s405, %s398
                  %s410 = sphi 0, %s423
                  %s411 = sphi %s401, %s426
                  %s412 = sphi %s403, %s427
                $region68: #{tpu_custom_call.1} parent=57 // loop_header_branch
                  %409 = sbr.rel (%p406) target = $region72
                $region69: #{tpu_custom_call.1} parent=57 // loop_body
                  %v413 = vld [vmem:[%s411] sm:$0xff]
                  %414 = vst [vmem:[%s412] sm:$0xff] %v413
                  %v415 = vld [vmem:[%s411 + $0x90] sm:$0xff]
                  %416 = vst [vmem:[%s412 + $0x40] sm:$0xff] %v415
                  %v417 = vld [vmem:[%s411 + $0x120] sm:$0xff]
                  %418 = vst [vmem:[%s412 + $0x80] sm:$0xff] %v417
                  %v419 = vld [vmem:[%s411 + $0x1b0] sm:$0xff]
                  %420 = vst [vmem:[%s412 + $0xc0] sm:$0xff] %v419
                  %s421 = sadd.s32 1, %s410
                  %p422 = scmp.ge.s32.totalorder %s421, %s398
                  %s423 = scalar_select %p422, 0, %s421
                  %s424 = smul.u32 %s423, 8
                  %s425 = smul.u32 %s423, 8
                  %s426 = scalar_lea.vmem %s401, %s424
                  %s427 = scalar_lea.vmem %s403, %s425 [#allocation2]
                $region70: #{tpu_custom_call.1} parent=57 // loop_footer
                  %s407 = sadd.s32 %s405, 1
                $region71: #{tpu_custom_call.1} parent=57 // loop_footer_branch
                  %404 = sbr.rel target = $region67
                $region72: #{tpu_custom_call.1} parent=57 // loop_exit
                  _
              $region58: #{tpu_custom_call.1} parent=35 // pred_fallthru
                _
              // Predicated region
              $region73: #{tpu_custom_call.1} parent=35 // pred_check
                _
              $region74: #{tpu_custom_call.1} parent=35 // pred_check_branch
                %429 = sbr.rel target = $region76
              $region75: #{tpu_custom_call.1} parent=35 // pred_region
                _
              $region76: #{tpu_custom_call.1} parent=35 // pred_fallthru
                _
            $region36: #{tpu_custom_call.1} parent=31 // pred_fallthru
              _
            // Predicated region
            $region37: #{tpu_custom_call.1} parent=31 // pred_check
              _
            $region38: #{tpu_custom_call.1} parent=31 // pred_check_branch
              %199 = sbr.rel target = $region40
            $region39: #{tpu_custom_call.1} parent=31 // pred_region
              %s201 = ssub.s32 256, 1
              %s202 = sshrl.u32 %s192, 3
              // While loop
              $region41: #{tpu_custom_call.1} parent=39 // loop_pre_header
                _
              $region42: #{tpu_custom_call.1} parent=39 // loop_header
                %s204 = sphi 0, %s206
                %p205 = scmp.ge.s32.totalorder %s204, %s202
                %s209 = sphi 0, %s278
                %s210 = sphi %s191, %s281
                %s211 = sphi %s179, %s282
              $region43: #{tpu_custom_call.1} parent=39 // loop_header_branch
                %208 = sbr.rel (%p205) target = $region47
              $region44: #{tpu_custom_call.1} parent=39 // loop_body
                %v212 = vld [vmem:[%s210] sm:%s201]
                %213 = vst [vmem:[%s211] sm:%s201] %v212
                %v214 = vld [vmem:[%s210 + $0x8] sm:%s201]
                %215 = vst [vmem:[%s211 + $0x8] sm:%s201] %v214
                %v216 = vld [vmem:[%s210 + $0x10] sm:%s201]
                %217 = vst [vmem:[%s211 + $0x10] sm:%s201] %v216
                %v218 = vld [vmem:[%s210 + $0x18] sm:%s201]
                %219 = vst [vmem:[%s211 + $0x18] sm:%s201] %v218
                %v220 = vld [vmem:[%s210 + $0x20] sm:%s201]
                %221 = vst [vmem:[%s211 + $0x20] sm:%s201] %v220
                %v222 = vld [vmem:[%s210 + $0x28] sm:%s201]
                %223 = vst [vmem:[%s211 + $0x28] sm:%s201] %v222
                %v224 = vld [vmem:[%s210 + $0x30] sm:%s201]
                %225 = vst [vmem:[%s211 + $0x30] sm:%s201] %v224
                %v226 = vld [vmem:[%s210 + $0x38] sm:%s201]
                %227 = vst [vmem:[%s211 + $0x38] sm:%s201] %v226
                %v228 = vld [vmem:[%s210 + $0x90] sm:%s201]
                %229 = vst [vmem:[%s211 + $0x40] sm:%s201] %v228
                %v230 = vld [vmem:[%s210 + $0x98] sm:%s201]
                %231 = vst [vmem:[%s211 + $0x48] sm:%s201] %v230
                %v232 = vld [vmem:[%s210 + $0xa0] sm:%s201]
                %233 = vst [vmem:[%s211 + $0x50] sm:%s201] %v232
                %v234 = vld [vmem:[%s210 + $0xa8] sm:%s201]
                %235 = vst [vmem:[%s211 + $0x58] sm:%s201] %v234
                %v236 = vld [vmem:[%s210 + $0xb0] sm:%s201]
                %237 = vst [vmem:[%s211 + $0x60] sm:%s201] %v236
                %v238 = vld [vmem:[%s210 + $0xb8] sm:%s201]
                %239 = vst [vmem:[%s211 + $0x68] sm:%s201] %v238
                %v240 = vld [vmem:[%s210 + $0xc0] sm:%s201]
                %241 = vst [vmem:[%s211 + $0x70] sm:%s201] %v240
                %v242 = vld [vmem:[%s210 + $0xc8] sm:%s201]
                %243 = vst [vmem:[%s211 + $0x78] sm:%s201] %v242
                %v244 = vld [vmem:[%s210 + $0x120] sm:%s201]
                %245 = vst [vmem:[%s211 + $0x80] sm:%s201] %v244
                %v246 = vld [vmem:[%s210 + $0x128] sm:%s201]
                %247 = vst [vmem:[%s211 + $0x88] sm:%s201] %v246
                %v248 = vld [vmem:[%s210 + $0x130] sm:%s201]
                %249 = vst [vmem:[%s211 + $0x90] sm:%s201] %v248
                %v250 = vld [vmem:[%s210 + $0x138] sm:%s201]
                %251 = vst [vmem:[%s211 + $0x98] sm:%s201] %v250
                %v252 = vld [vmem:[%s210 + $0x140] sm:%s201]
                %253 = vst [vmem:[%s211 + $0xa0] sm:%s201] %v252
                %v254 = vld [vmem:[%s210 + $0x148] sm:%s201]
                %255 = vst [vmem:[%s211 + $0xa8] sm:%s201] %v254
                %v256 = vld [vmem:[%s210 + $0x150] sm:%s201]
                %257 = vst [vmem:[%s211 + $0xb0] sm:%s201] %v256
                %v258 = vld [vmem:[%s210 + $0x158] sm:%s201]
                %259 = vst [vmem:[%s211 + $0xb8] sm:%s201] %v258
                %v260 = vld [vmem:[%s210 + $0x1b0] sm:%s201]
                %261 = vst [vmem:[%s211 + $0xc0] sm:%s201] %v260
                %v262 = vld [vmem:[%s210 + $0x1b8] sm:%s201]
                %263 = vst [vmem:[%s211 + $0xc8] sm:%s201] %v262
                %v264 = vld [vmem:[%s210 + $0x1c0] sm:%s201]
                %265 = vst [vmem:[%s211 + $0xd0] sm:%s201] %v264
                %v266 = vld [vmem:[%s210 + $0x1c8] sm:%s201]
                %267 = vst [vmem:[%s211 + $0xd8] sm:%s201] %v266
                %v268 = vld [vmem:[%s210 + $0x1d0] sm:%s201]
                %269 = vst [vmem:[%s211 + $0xe0] sm:%s201] %v268
                %v270 = vld [vmem:[%s210 + $0x1d8] sm:%s201]
                %271 = vst [vmem:[%s211 + $0xe8] sm:%s201] %v270
                %v272 = vld [vmem:[%s210 + $0x1e0] sm:%s201]
                %273 = vst [vmem:[%s211 + $0xf0] sm:%s201] %v272
                %v274 = vld [vmem:[%s210 + $0x1e8] sm:%s201]
                %275 = vst [vmem:[%s211 + $0xf8] sm:%s201] %v274
                %s276 = sadd.s32 1, %s209
                %p277 = scmp.ge.s32.totalorder %s276, %s202
                %s278 = scalar_select %p277, 0, %s276
                %s279 = smul.u32 %s278, 64
                %s280 = smul.u32 %s278, 64
                %s281 = scalar_lea.vmem %s191, %s279
                %s282 = scalar_lea.vmem %s179, %s280 [#allocation2]
              $region45: #{tpu_custom_call.1} parent=39 // loop_footer
                %s206 = sadd.s32 %s204, 1
              $region46: #{tpu_custom_call.1} parent=39 // loop_footer_branch
                %203 = sbr.rel target = $region42
              $region47: #{tpu_custom_call.1} parent=39 // loop_exit
                _
              %s283 = sshrl.u32 %s192, 3
              %s284 = sand.u32 %s192, 7
              %s285 = smul.u32 %s283, 8
              %s286 = smul.u32 8, %s285
              %s287 = scalar_lea.vmem %s191, %s286
              %s288 = smul.u32 8, %s285
              %s289 = scalar_lea.vmem %s179, %s288 [#allocation2]
              // While loop
              $region48: #{tpu_custom_call.1} parent=39 // loop_pre_header
                _
              $region49: #{tpu_custom_call.1} parent=39 // loop_header
                %s291 = sphi 0, %s293
                %p292 = scmp.ge.s32.totalorder %s291, %s284
                %s296 = sphi 0, %s309
                %s297 = sphi %s287, %s312
                %s298 = sphi %s289, %s313
              $region50: #{tpu_custom_call.1} parent=39 // loop_header_branch
                %295 = sbr.rel (%p292) target = $region54
              $region51: #{tpu_custom_call.1} parent=39 // loop_body
                %v299 = vld [vmem:[%s297] sm:%s201]
                %300 = vst [vmem:[%s298] sm:%s201] %v299
                %v301 = vld [vmem:[%s297 + $0x90] sm:%s201]
                %302 = vst [vmem:[%s298 + $0x40] sm:%s201] %v301
                %v303 = vld [vmem:[%s297 + $0x120] sm:%s201]
                %304 = vst [vmem:[%s298 + $0x80] sm:%s201] %v303
                %v305 = vld [vmem:[%s297 + $0x1b0] sm:%s201]
                %306 = vst [vmem:[%s298 + $0xc0] sm:%s201] %v305
                %s307 = sadd.s32 1, %s296
                %p308 = scmp.ge.s32.totalorder %s307, %s284
                %s309 = scalar_select %p308, 0, %s307
                %s310 = smul.u32 %s309, 8
                %s311 = smul.u32 %s309, 8
                %s312 = scalar_lea.vmem %s287, %s310
                %s313 = scalar_lea.vmem %s289, %s311 [#allocation2]
              $region52: #{tpu_custom_call.1} parent=39 // loop_footer
                %s293 = sadd.s32 %s291, 1
              $region53: #{tpu_custom_call.1} parent=39 // loop_footer_branch
                %290 = sbr.rel target = $region49
              $region54: #{tpu_custom_call.1} parent=39 // loop_exit
                _
            $region40: #{tpu_custom_call.1} parent=31 // pred_fallthru
              _
          $region32: #{tpu_custom_call.1} parent=27 // pred_fallthru
            _
          %430 = vnop
        $region28: #{tpu_custom_call.1} parent=23 // pred_fallthru
          _
        // Predicated region
        $region77: #{tpu_custom_call.1} parent=23 // pred_check
          %p431 = pneg %p72
        $region78: #{tpu_custom_call.1} parent=23 // pred_check_branch
          %433 = sbr.rel (%p431) target = $region80
        $region79: #{tpu_custom_call.1} parent=23 // pred_region
          %s434 = sand.u32 %s62, 1
          %s435 = sand.u32 %s62, 1
          %s436 = smul.addr %s435, 64
          %s437 = scalar_lea.vmem [#allocation3], %s436
          %s438 = smul.addr %s18, 2
          %s439 = smul.addr %s17, 16
          %s440 = sadd.s32 %s438, %s439
          %s441 = smul.addr %s440, 8
          %s442 = scalar_lea.vmem %s1, %s441
          // Predicated region
          $region81: #{tpu_custom_call.1} parent=79 // pred_check
            _
          $region82: #{tpu_custom_call.1} parent=79 // pred_check_branch
            %444 = sbr.rel (0) target = $region84
          $region83: #{tpu_custom_call.1} parent=79 // pred_region
            // Predicated region
            $region85: #{tpu_custom_call.1} parent=83 // pred_check
              _
            $region86: #{tpu_custom_call.1} parent=83 // pred_check_branch
              %446 = sbr.rel (0) target = $region88
            $region87: #{tpu_custom_call.1} parent=83 // pred_region
              // Predicated region
              $region100: #{tpu_custom_call.1} parent=87 // pred_check
                _
              $region101: #{tpu_custom_call.1} parent=87 // pred_check_branch
                %476 = sbr.rel (0) target = $region103
              $region102: #{tpu_custom_call.1} parent=87 // pred_region
                loop: start=0, step=1, limit=1
                $region104: #{tpu_custom_call.1} parent=102 // loop_pre_header
                  _
                $region105: #{tpu_custom_call.1} parent=102 // loop_header
                  %s478 = sphi 0, %s482
                  %p479 = scmp.ge.s32.totalorder %s478, 1
                  %s483 = sphi %s442, %s442
                  %s484 = sphi %s437, %s437
                $region106: #{tpu_custom_call.1} parent=102 // loop_header_branch
                  %481 = sbr.rel (%p479) target = $region110
                $region107: #{tpu_custom_call.1} parent=102 // loop_body
                  %v485 = vld [vmem:[%s483] sm:$0xff]
                  %486 = vst [vmem:[%s484] sm:$0xff] %v485
                  %v487 = vld [vmem:[%s483 + $0x8] sm:$0xff]
                  %488 = vst [vmem:[%s484 + $0x8] sm:$0xff] %v487
                  %v489 = vld [vmem:[%s483 + $0x20] sm:$0xff]
                  %490 = vst [vmem:[%s484 + $0x10] sm:$0xff] %v489
                  %v491 = vld [vmem:[%s483 + $0x28] sm:$0xff]
                  %492 = vst [vmem:[%s484 + $0x18] sm:$0xff] %v491
                  %v493 = vld [vmem:[%s483 + $0x40] sm:$0xff]
                  %494 = vst [vmem:[%s484 + $0x20] sm:$0xff] %v493
                  %v495 = vld [vmem:[%s483 + $0x48] sm:$0xff]
                  %496 = vst [vmem:[%s484 + $0x28] sm:$0xff] %v495
                  %v497 = vld [vmem:[%s483 + $0x60] sm:$0xff]
                  %498 = vst [vmem:[%s484 + $0x30] sm:$0xff] %v497
                  %v499 = vld [vmem:[%s483 + $0x68] sm:$0xff]
                  %500 = vst [vmem:[%s484 + $0x38] sm:$0xff] %v499
                $region108: #{tpu_custom_call.1} parent=102 // loop_footer
                  %s482 = sadd.s32 1, %s478
                $region109: #{tpu_custom_call.1} parent=102 // loop_footer_branch
                  %477 = sbr.rel target = $region105
                $region110: #{tpu_custom_call.1} parent=102 // loop_exit
                  _
              $region103: #{tpu_custom_call.1} parent=87 // pred_fallthru
                _
              // Predicated region
              $region111: #{tpu_custom_call.1} parent=87 // pred_check
                _
              $region112: #{tpu_custom_call.1} parent=87 // pred_check_branch
                %502 = sbr.rel target = $region114
              $region113: #{tpu_custom_call.1} parent=87 // pred_region
                _
              $region114: #{tpu_custom_call.1} parent=87 // pred_fallthru
                _
            $region88: #{tpu_custom_call.1} parent=83 // pred_fallthru
              _
            // Predicated region
            $region89: #{tpu_custom_call.1} parent=83 // pred_check
              _
            $region90: #{tpu_custom_call.1} parent=83 // pred_check_branch
              %448 = sbr.rel target = $region92
            $region91: #{tpu_custom_call.1} parent=83 // pred_region
              %s450 = ssub.s32 256, 1
              loop: start=0, step=1, limit=1
              $region93: #{tpu_custom_call.1} parent=91 // loop_pre_header
                _
              $region94: #{tpu_custom_call.1} parent=91 // loop_header
                %s452 = sphi 0, %s456
                %p453 = scmp.ge.s32.totalorder %s452, 1
                %s457 = sphi %s442, %s442
                %s458 = sphi %s437, %s437
              $region95: #{tpu_custom_call.1} parent=91 // loop_header_branch
                %455 = sbr.rel (%p453) target = $region99
              $region96: #{tpu_custom_call.1} parent=91 // loop_body
                %v459 = vld [vmem:[%s457] sm:%s450]
                %460 = vst [vmem:[%s458] sm:%s450] %v459
                %v461 = vld [vmem:[%s457 + $0x8] sm:%s450]
                %462 = vst [vmem:[%s458 + $0x8] sm:%s450] %v461
                %v463 = vld [vmem:[%s457 + $0x20] sm:%s450]
                %464 = vst [vmem:[%s458 + $0x10] sm:%s450] %v463
                %v465 = vld [vmem:[%s457 + $0x28] sm:%s450]
                %466 = vst [vmem:[%s458 + $0x18] sm:%s450] %v465
                %v467 = vld [vmem:[%s457 + $0x40] sm:%s450]
                %468 = vst [vmem:[%s458 + $0x20] sm:%s450] %v467
                %v469 = vld [vmem:[%s457 + $0x48] sm:%s450]
                %470 = vst [vmem:[%s458 + $0x28] sm:%s450] %v469
                %v471 = vld [vmem:[%s457 + $0x60] sm:%s450]
                %472 = vst [vmem:[%s458 + $0x30] sm:%s450] %v471
                %v473 = vld [vmem:[%s457 + $0x68] sm:%s450]
                %474 = vst [vmem:[%s458 + $0x38] sm:%s450] %v473
              $region97: #{tpu_custom_call.1} parent=91 // loop_footer
                %s456 = sadd.s32 1, %s452
              $region98: #{tpu_custom_call.1} parent=91 // loop_footer_branch
                %451 = sbr.rel target = $region94
              $region99: #{tpu_custom_call.1} parent=91 // loop_exit
                _
            $region92: #{tpu_custom_call.1} parent=83 // pred_fallthru
              _
          $region84: #{tpu_custom_call.1} parent=79 // pred_fallthru
            _
          %503 = vnop
        $region80: #{tpu_custom_call.1} parent=23 // pred_fallthru
          _
      $region24: #{tpu_custom_call.1} parent=5 // pred_fallthru
        _
      %p504 = scmp.le.s32.totalorder 1, %s10
      %p505 = scmp.lt.s32.totalorder %s10, 5
      %p506 = pnand %p504, %p505
      %p507 = pneg %p506
      // Predicated region
      $region115: #{tpu_custom_call.1} parent=5 // pred_check
        _
      $region116: #{tpu_custom_call.1} parent=5 // pred_check_branch
        %509 = sbr.rel (%p506) target = $region118
      $region117: #{tpu_custom_call.1} parent=5 // pred_region
        %s510 = ssub.s32 %s10, 1
        %s511 = sand.u32 %s37, 1
        %s512 = sand.u32 %s37, 1
        %s513 = smul.addr %s512, 256
        %s514 = scalar_lea.vmem [#allocation2], %s513
        // Predicated region
        $region119: #{tpu_custom_call.1} parent=117 // pred_check
          %p515 = pneg %p50
        $region120: #{tpu_custom_call.1} parent=117 // pred_check_branch
          %517 = sbr.rel (%p515) target = $region122
        $region121: #{tpu_custom_call.1} parent=117 // pred_region
          _
        $region122: #{tpu_custom_call.1} parent=117 // pred_fallthru
          _
        %s518 = sand.u32 %s65, 1
        %s519 = sand.u32 %s65, 1
        %s520 = smul.addr %s519, 64
        %s521 = scalar_lea.vmem [#allocation3], %s520
        // Predicated region
        $region123: #{tpu_custom_call.1} parent=117 // pred_check
          %p522 = pneg %p78
        $region124: #{tpu_custom_call.1} parent=117 // pred_check_branch
          %524 = sbr.rel (%p522) target = $region126
        $region125: #{tpu_custom_call.1} parent=117 // pred_region
          _
        $region126: #{tpu_custom_call.1} parent=117 // pred_fallthru
          _
        %s525 = sand.u32 %s37, 1
        %s526 = sand.u32 %s37, 1
        %s527 = smul.addr %s526, 256
        %s528 = scalar_lea.vmem [#allocation2], %s527
        %p529 = pneg %p50
        %p530 = pneg %p47
        %s531 = sand.u32 %s65, 1
        %s532 = sand.u32 %s65, 1
        %s533 = smul.addr %s532, 64
        %s534 = scalar_lea.vmem [#allocation3], %s533
        %p535 = pneg %p78
        %p536 = pneg %p75
        %p537 = pneg %p99
        %p538 = pneg %p96
        %p539 = pneg %p120
        %p540 = pneg %p117
        %p541 = pneg %p148
        %p542 = pneg %p145
        %s543 = smul.u32 4, %s20
        %p544 = scmp.lt.s32.totalorder %s19, 1
        %s545 = scalar_select %p544, %s19, 1
        %p546 = scmp.lt.s32.totalorder %s543, 7
        %s547 = scalar_select %p546, %s543, 7
        %s548 = smul.addr %s545, 8
        %s549 = sadd.s32 %s547, %s548
        %s550 = smul.addr %s549, 8
        %s551 = scalar_lea.vmem %s4, %s550
        %s552 = smul.u32 4, %s20
        %s553 = ssub.s32 9, %s552
        %p554 = scmp.lt.s32.totalorder %s553, 4
        %s555 = scalar_select %p554, %s553, 4
        %s556 = smul.u32 512, %s555
        %s557 = smul.u32 %s556, 2
        %s558 = smul.u32 4, %s20
        %p559 = scmp.lt.s32.totalorder %s19, 1
        %s560 = scalar_select %p559, %s19, 1
        %p561 = scmp.lt.s32.totalorder %s558, 7
        %s562 = scalar_select %p561, %s558, 7
        %s563 = smul.addr %s560, 8
        %s564 = sadd.s32 %s562, %s563
        %s565 = smul.addr %s564, 8
        %s566 = scalar_lea.vmem %s4, %s565
        %s567 = smul.u32 4, %s20
        %v568 = vld [vmem:[%s3] sm:$0x1]
        %v570 = vlaneseq
        %v571 = vshrl.u32 %v570, 7
        %v572 = vsub.s32 0, %v571
        %v573 = vrot.slane %v568, %v572
        %v575 = vld [vmem:[%s514] sm:$0xff]
        %v576 = vld [vmem:[%s514 + $0x8] sm:$0x1]
        %v577 = vld [vmem:[%s514 + $0x10] sm:$0xff]
        %v578 = vld [vmem:[%s514 + $0x18] sm:$0x1]
        %v579 = vld [vmem:[%s514 + $0x20] sm:$0xff]
        %v580 = vld [vmem:[%s514 + $0x28] sm:$0x1]
        %v581 = vld [vmem:[%s514 + $0x30] sm:$0xff]
        %v582 = vld [vmem:[%s514 + $0x38] sm:$0x1]
        %s583 = scalar_lea.vmem %s514, 64 [#allocation2]
        %v584 = vld [vmem:[%s583] sm:$0xff]
        %v585 = vld [vmem:[%s583 + $0x10] sm:$0xff]
        %v586 = vld [vmem:[%s583 + $0x20] sm:$0xff]
        %v587 = vld [vmem:[%s583 + $0x30] sm:$0xff]
        %v588 = vld [vmem:[%s2] sm:$0xf]
        %vm589 = vcmask 31744
        %v591 = vsel %vm589, %v575, 0
        %v594 = vsel %vm589, %v577, 0
        %v597 = vsel %vm589, %v579, 0
        %v600 = vsel %vm589, %v581, 0
        %vm602 = vcmask 1043456
        %v604 = vsel %vm602, %v588, 0
        %606 = vmatprep.subr.mxu0 0.0
        %607 = vmatpush1.msra.mxu0 0.0
        %608 = vmatprep.subr.mxu0 0.0
        %609 = vmatpush1.msra.mxu0 0.0
        %610 = vmatprep.subr.mxu0 0.0
        %611 = vmatpush1.msra.mxu0 0.0
        %612 = vmatprep.subr.mxu0 0.0
        %613 = vmatpush1.msra.mxu0 0.0
        %614 = vmatprep.subr.mxu0 0.0
        %615 = vmatpush1.msra.mxu0 0.0
        %616 = vmatprep.subr.mxu0 0.0
        %617 = vmatpush1.msra.mxu0 0.0
        %618 = vmatprep.subr.mxu0 0.0
        %619 = vmatpush1.msra.mxu0 0.0
        %620 = vmatprep.subr.mxu0 0.0
        %621 = vmatpush1.msra.mxu0 0.0
        %622 = vmatprep.subr.mxu0 0.0
        %623 = vmatpush1.msra.mxu0 0.0
        %624 = vmatprep.subr.mxu0 0.0
        %625 = vmatpush1.msra.mxu0 0.0
        %626 = vmatprep.subr.mxu0 0.0
        %627 = vmatpush1.msra.mxu0 0.0
        %628 = vmatprep.subr.mxu0 0.0
        %629 = vmatpush1.msra.mxu0 0.0
        %630 = vmatprep.subr.mxu0 0.0
        %631 = vmatpush1.msra.mxu0 0.0
        %632 = vmatprep.subr.mxu0 0.0
        %633 = vmatpush1.msra.mxu0 0.0
        %634 = vmatprep.subr.mxu0 0.0
        %635 = vmatpush1.msra.mxu0 0.0
        %636 = vmatprep.subr.mxu0 0.0
        %637 = vmatpush1.msra.mxu0 %v604
        %638 = vmatprep.subr.mxu0 0.0
        %639 = vmatpush2.msra.mxu0 0.0
        %640 = vmatprep.subr.mxu0 0.0
        %641 = vmatpush2.msra.mxu0 0.0
        %642 = vmatprep.subr.mxu0 0.0
        %643 = vmatpush2.msra.mxu0 0.0
        %644 = vmatprep.subr.mxu0 0.0
        %645 = vmatpush2.msra.mxu0 0.0
        %646 = vmatprep.subr.mxu0 0.0
        %647 = vmatpush2.msra.mxu0 0.0
        %648 = vmatprep.subr.mxu0 0.0
        %649 = vmatpush2.msra.mxu0 0.0
        %650 = vmatprep.subr.mxu0 0.0
        %651 = vmatpush2.msra.mxu0 0.0
        %652 = vmatprep.subr.mxu0 0.0
        %653 = vmatpush2.msra.mxu0 0.0
        %654 = vmatprep.subr.mxu0 0.0
        %655 = vmatpush2.msra.mxu0 0.0
        %656 = vmatprep.subr.mxu0 0.0
        %657 = vmatpush2.msra.mxu0 0.0
        %658 = vmatprep.subr.mxu0 0.0
        %659 = vmatpush2.msra.mxu0 0.0
        %660 = vmatprep.subr.mxu0 0.0
        %661 = vmatpush2.msra.mxu0 0.0
        %662 = vmatprep.subr.mxu0 0.0
        %663 = vmatpush2.msra.mxu0 0.0
        %664 = vmatprep.subr.mxu0 0.0
        %665 = vmatpush2.msra.mxu0 0.0
        %666 = vmatprep.subr.mxu0 0.0
        %667 = vmatpush2.msra.mxu0 0.0
        %668 = vmatprep.subr.mxu0 0.0
        %669 = vmatpush2.msra.mxu0 0.0
        %670 = vmatprep.mubr.f32.mxu0 0.0
        %671 = vmatmul.mubr.f32.gmra.mxu0 %v591
        %v672 = vpop.f32.mrf.mxu0
        %v673 = vadd.f32 0.0, %v672
        %v674 = vpop.f32.mrf.mxu0
        %675 = vmatprep.mubr.f32.mxu0 0.0
        %676 = vmatmul.mubr.f32.gmra.mxu0 %v594
        %v677 = vpop.f32.mrf.mxu0
        %v678 = vadd.f32 0.0, %v677
        %v679 = vpop.f32.mrf.mxu0
        %680 = vmatprep.mubr.f32.mxu0 0.0
        %681 = vmatmul.mubr.f32.gmra.mxu0 %v597
        %v682 = vpop.f32.mrf.mxu0
        %v683 = vadd.f32 0.0, %v682
        %v684 = vpop.f32.mrf.mxu0
        %685 = vmatprep.mubr.f32.mxu0 0.0
        %686 = vmatmul.mubr.f32.gmra.mxu0 %v600
        %v687 = vpop.f32.mrf.mxu0
        %v688 = vadd.f32 0.0, %v687
        %v689 = vpop.f32.mrf.mxu0
        %690 = vdwg.mxu0
        %v691 = vadd.f32 %v573, %v673
        %v692 = vadd.f32 %v573, %v678
        %v693 = vadd.f32 %v573, %v683
        %v694 = vadd.f32 %v573, %v688
        %s695 = scalar_lea.vmem %s2, 4
        %v696 = vld [vmem:[%s695] sm:$0xf]
        %v698 = vsel %vm589, %v584, 0
        %v701 = vsel %vm589, %v585, 0
        %v704 = vsel %vm589, %v586, 0
        %v707 = vsel %vm589, %v587, 0
        %v710 = vsel %vm602, %v696, 0
        %712 = vmatprep.subr.mxu0 0.0
        %713 = vmatpush1.msra.mxu0 0.0
        %714 = vmatprep.subr.mxu0 0.0
        %715 = vmatpush1.msra.mxu0 0.0
        %716 = vmatprep.subr.mxu0 0.0
        %717 = vmatpush1.msra.mxu0 0.0
        %718 = vmatprep.subr.mxu0 0.0
        %719 = vmatpush1.msra.mxu0 0.0
        %720 = vmatprep.subr.mxu0 0.0
        %721 = vmatpush1.msra.mxu0 0.0
        %722 = vmatprep.subr.mxu0 0.0
        %723 = vmatpush1.msra.mxu0 0.0
        %724 = vmatprep.subr.mxu0 0.0
        %725 = vmatpush1.msra.mxu0 0.0
        %726 = vmatprep.subr.mxu0 0.0
        %727 = vmatpush1.msra.mxu0 0.0
        %728 = vmatprep.subr.mxu0 0.0
        %729 = vmatpush1.msra.mxu0 0.0
        %730 = vmatprep.subr.mxu0 0.0
        %731 = vmatpush1.msra.mxu0 0.0
        %732 = vmatprep.subr.mxu0 0.0
        %733 = vmatpush1.msra.mxu0 0.0
        %734 = vmatprep.subr.mxu0 0.0
        %735 = vmatpush1.msra.mxu0 0.0
        %736 = vmatprep.subr.mxu0 0.0
        %737 = vmatpush1.msra.mxu0 0.0
        %738 = vmatprep.subr.mxu0 0.0
        %739 = vmatpush1.msra.mxu0 0.0
        %740 = vmatprep.subr.mxu0 0.0
        %741 = vmatpush1.msra.mxu0 0.0
        %742 = vmatprep.subr.mxu0 0.0
        %743 = vmatpush1.msra.mxu0 %v710
        %744 = vmatprep.subr.mxu0 0.0
        %745 = vmatpush2.msra.mxu0 0.0
        %746 = vmatprep.subr.mxu0 0.0
        %747 = vmatpush2.msra.mxu0 0.0
        %748 = vmatprep.subr.mxu0 0.0
        %749 = vmatpush2.msra.mxu0 0.0
        %750 = vmatprep.subr.mxu0 0.0
        %751 = vmatpush2.msra.mxu0 0.0
        %752 = vmatprep.subr.mxu0 0.0
        %753 = vmatpush2.msra.mxu0 0.0
        %754 = vmatprep.subr.mxu0 0.0
        %755 = vmatpush2.msra.mxu0 0.0
        %756 = vmatprep.subr.mxu0 0.0
        %757 = vmatpush2.msra.mxu0 0.0
        %758 = vmatprep.subr.mxu0 0.0
        %759 = vmatpush2.msra.mxu0 0.0
        %760 = vmatprep.subr.mxu0 0.0
        %761 = vmatpush2.msra.mxu0 0.0
        %762 = vmatprep.subr.mxu0 0.0
        %763 = vmatpush2.msra.mxu0 0.0
        %764 = vmatprep.subr.mxu0 0.0
        %765 = vmatpush2.msra.mxu0 0.0
        %766 = vmatprep.subr.mxu0 0.0
        %767 = vmatpush2.msra.mxu0 0.0
        %768 = vmatprep.subr.mxu0 0.0
        %769 = vmatpush2.msra.mxu0 0.0
        %770 = vmatprep.subr.mxu0 0.0
        %771 = vmatpush2.msra.mxu0 0.0
        %772 = vmatprep.subr.mxu0 0.0
        %773 = vmatpush2.msra.mxu0 0.0
        %774 = vmatprep.subr.mxu0 0.0
        %775 = vmatpush2.msra.mxu0 0.0
        %776 = vmatprep.mubr.f32.mxu0 0.0
        %777 = vmatmul.mubr.f32.gmra.mxu0 %v698
        %v778 = vpop.f32.mrf.mxu0
        %v779 = vadd.f32 0.0, %v778
        %v780 = vpop.f32.mrf.mxu0
        %781 = vmatprep.mubr.f32.mxu0 0.0
        %782 = vmatmul.mubr.f32.gmra.mxu0 %v701
        %v783 = vpop.f32.mrf.mxu0
        %v784 = vadd.f32 0.0, %v783
        %v785 = vpop.f32.mrf.mxu0
        %786 = vmatprep.mubr.f32.mxu0 0.0
        %787 = vmatmul.mubr.f32.gmra.mxu0 %v704
        %v788 = vpop.f32.mrf.mxu0
        %v789 = vadd.f32 0.0, %v788
        %v790 = vpop.f32.mrf.mxu0
        %791 = vmatprep.mubr.f32.mxu0 0.0
        %792 = vmatmul.mubr.f32.gmra.mxu0 %v707
        %v793 = vpop.f32.mrf.mxu0
        %v794 = vadd.f32 0.0, %v793
        %v795 = vpop.f32.mrf.mxu0
        %796 = vdwg.mxu0
        %v797 = vadd.f32 %v691, %v779
        %v798 = vadd.f32 %v692, %v784
        %v799 = vadd.f32 %v693, %v789
        %v800 = vadd.f32 %v694, %v794
        %vm805 = vcmask 1046528
        %v806 = vrot.slane %v575, 1
        %v807 = vrot.slane %v576, 1
        %v808 = vsel %vm805, %v806, %v807
        %v809 = vrot.slane %v577, 1
        %v810 = vrot.slane %v578, 1
        %v811 = vsel %vm805, %v809, %v810
        %v812 = vrot.slane %v579, 1
        %v813 = vrot.slane %v580, 1
        %v814 = vsel %vm805, %v812, %v813
        %v815 = vrot.slane %v581, 1
        %v816 = vrot.slane %v582, 1
        %v817 = vsel %vm805, %v815, %v816
        %s818 = scalar_lea.vmem %s2, 8
        %v819 = vld [vmem:[%s818] sm:$0xf]
        %v820 = vsel %vm589, %v808, 0
        %v822 = vsel %vm589, %v811, 0
        %v824 = vsel %vm589, %v814, 0
        %v826 = vsel %vm589, %v817, 0
        %v829 = vsel %vm602, %v819, 0
        %831 = vmatprep.subr.mxu0 0.0
        %832 = vmatpush1.msra.mxu0 0.0
        %833 = vmatprep.subr.mxu0 0.0
        %834 = vmatpush1.msra.mxu0 0.0
        %835 = vmatprep.subr.mxu0 0.0
        %836 = vmatpush1.msra.mxu0 0.0
        %837 = vmatprep.subr.mxu0 0.0
        %838 = vmatpush1.msra.mxu0 0.0
        %839 = vmatprep.subr.mxu0 0.0
        %840 = vmatpush1.msra.mxu0 0.0
        %841 = vmatprep.subr.mxu0 0.0
        %842 = vmatpush1.msra.mxu0 0.0
        %843 = vmatprep.subr.mxu0 0.0
        %844 = vmatpush1.msra.mxu0 0.0
        %845 = vmatprep.subr.mxu0 0.0
        %846 = vmatpush1.msra.mxu0 0.0
        %847 = vmatprep.subr.mxu0 0.0
        %848 = vmatpush1.msra.mxu0 0.0
        %849 = vmatprep.subr.mxu0 0.0
        %850 = vmatpush1.msra.mxu0 0.0
        %851 = vmatprep.subr.mxu0 0.0
        %852 = vmatpush1.msra.mxu0 0.0
        %853 = vmatprep.subr.mxu0 0.0
        %854 = vmatpush1.msra.mxu0 0.0
        %855 = vmatprep.subr.mxu0 0.0
        %856 = vmatpush1.msra.mxu0 0.0
        %857 = vmatprep.subr.mxu0 0.0
        %858 = vmatpush1.msra.mxu0 0.0
        %859 = vmatprep.subr.mxu0 0.0
        %860 = vmatpush1.msra.mxu0 0.0
        %861 = vmatprep.subr.mxu0 0.0
        %862 = vmatpush1.msra.mxu0 %v829
        %863 = vmatprep.subr.mxu0 0.0
        %864 = vmatpush2.msra.mxu0 0.0
        %865 = vmatprep.subr.mxu0 0.0
        %866 = vmatpush2.msra.mxu0 0.0
        %867 = vmatprep.subr.mxu0 0.0
        %868 = vmatpush2.msra.mxu0 0.0
        %869 = vmatprep.subr.mxu0 0.0
        %870 = vmatpush2.msra.mxu0 0.0
        %871 = vmatprep.subr.mxu0 0.0
        %872 = vmatpush2.msra.mxu0 0.0
        %873 = vmatprep.subr.mxu0 0.0
        %874 = vmatpush2.msra.mxu0 0.0
        %875 = vmatprep.subr.mxu0 0.0
        %876 = vmatpush2.msra.mxu0 0.0
        %877 = vmatprep.subr.mxu0 0.0
        %878 = vmatpush2.msra.mxu0 0.0
        %879 = vmatprep.subr.mxu0 0.0
        %880 = vmatpush2.msra.mxu0 0.0
        %881 = vmatprep.subr.mxu0 0.0
        %882 = vmatpush2.msra.mxu0 0.0
        %883 = vmatprep.subr.mxu0 0.0
        %884 = vmatpush2.msra.mxu0 0.0
        %885 = vmatprep.subr.mxu0 0.0
        %886 = vmatpush2.msra.mxu0 0.0
        %887 = vmatprep.subr.mxu0 0.0
        %888 = vmatpush2.msra.mxu0 0.0
        %889 = vmatprep.subr.mxu0 0.0
        %890 = vmatpush2.msra.mxu0 0.0
        %891 = vmatprep.subr.mxu0 0.0
        %892 = vmatpush2.msra.mxu0 0.0
        %893 = vmatprep.subr.mxu0 0.0
        %894 = vmatpush2.msra.mxu0 0.0
        %895 = vmatprep.mubr.f32.mxu0 0.0
        %896 = vmatmul.mubr.f32.gmra.mxu0 %v820
        %v897 = vpop.f32.mrf.mxu0
        %v898 = vadd.f32 0.0, %v897
        %v899 = vpop.f32.mrf.mxu0
        %900 = vmatprep.mubr.f32.mxu0 0.0
        %901 = vmatmul.mubr.f32.gmra.mxu0 %v822
        %v902 = vpop.f32.mrf.mxu0
        %v903 = vadd.f32 0.0, %v902
        %v904 = vpop.f32.mrf.mxu0
        %905 = vmatprep.mubr.f32.mxu0 0.0
        %906 = vmatmul.mubr.f32.gmra.mxu0 %v824
        %v907 = vpop.f32.mrf.mxu0
        %v908 = vadd.f32 0.0, %v907
        %v909 = vpop.f32.mrf.mxu0
        %910 = vmatprep.mubr.f32.mxu0 0.0
        %911 = vmatmul.mubr.f32.gmra.mxu0 %v826
        %v912 = vpop.f32.mrf.mxu0
        %v913 = vadd.f32 0.0, %v912
        %v914 = vpop.f32.mrf.mxu0
        %915 = vdwg.mxu0
        %v916 = vadd.f32 %v797, %v898
        %v917 = vadd.f32 %v798, %v903
        %v918 = vadd.f32 %v799, %v908
        %v919 = vadd.f32 %v800, %v913
        %s920 = scalar_lea.vmem %s514, 128 [#allocation2]
        %v921 = vld [vmem:[%s920] sm:$0xff]
        %v922 = vld [vmem:[%s920 + $0x8] sm:$0x1]
        %v923 = vld [vmem:[%s920 + $0x10] sm:$0xff]
        %v924 = vld [vmem:[%s920 + $0x18] sm:$0x1]
        %v925 = vld [vmem:[%s920 + $0x20] sm:$0xff]
        %v926 = vld [vmem:[%s920 + $0x28] sm:$0x1]
        %v927 = vld [vmem:[%s920 + $0x30] sm:$0xff]
        %v928 = vld [vmem:[%s920 + $0x38] sm:$0x1]
        %s929 = scalar_lea.vmem %s514, 192 [#allocation2]
        %v930 = vld [vmem:[%s929] sm:$0xff]
        %v931 = vld [vmem:[%s929 + $0x10] sm:$0xff]
        %v932 = vld [vmem:[%s929 + $0x20] sm:$0xff]
        %v933 = vld [vmem:[%s929 + $0x30] sm:$0xff]
        %s934 = scalar_lea.vmem %s2, 12
        %v935 = vld [vmem:[%s934] sm:$0xf]
        %v937 = vsel %vm589, %v921, 0
        %v940 = vsel %vm589, %v923, 0
        %v943 = vsel %vm589, %v925, 0
        %v946 = vsel %vm589, %v927, 0
        %v949 = vsel %vm602, %v935, 0
        %951 = vmatprep.subr.mxu0 0.0
        %952 = vmatpush1.msra.mxu0 0.0
        %953 = vmatprep.subr.mxu0 0.0
        %954 = vmatpush1.msra.mxu0 0.0
        %955 = vmatprep.subr.mxu0 0.0
        %956 = vmatpush1.msra.mxu0 0.0
        %957 = vmatprep.subr.mxu0 0.0
        %958 = vmatpush1.msra.mxu0 0.0
        %959 = vmatprep.subr.mxu0 0.0
        %960 = vmatpush1.msra.mxu0 0.0
        %961 = vmatprep.subr.mxu0 0.0
        %962 = vmatpush1.msra.mxu0 0.0
        %963 = vmatprep.subr.mxu0 0.0
        %964 = vmatpush1.msra.mxu0 0.0
        %965 = vmatprep.subr.mxu0 0.0
        %966 = vmatpush1.msra.mxu0 0.0
        %967 = vmatprep.subr.mxu0 0.0
        %968 = vmatpush1.msra.mxu0 0.0
        %969 = vmatprep.subr.mxu0 0.0
        %970 = vmatpush1.msra.mxu0 0.0
        %971 = vmatprep.subr.mxu0 0.0
        %972 = vmatpush1.msra.mxu0 0.0
        %973 = vmatprep.subr.mxu0 0.0
        %974 = vmatpush1.msra.mxu0 0.0
        %975 = vmatprep.subr.mxu0 0.0
        %976 = vmatpush1.msra.mxu0 0.0
        %977 = vmatprep.subr.mxu0 0.0
        %978 = vmatpush1.msra.mxu0 0.0
        %979 = vmatprep.subr.mxu0 0.0
        %980 = vmatpush1.msra.mxu0 0.0
        %981 = vmatprep.subr.mxu0 0.0
        %982 = vmatpush1.msra.mxu0 %v949
        %983 = vmatprep.subr.mxu0 0.0
        %984 = vmatpush2.msra.mxu0 0.0
        %985 = vmatprep.subr.mxu0 0.0
        %986 = vmatpush2.msra.mxu0 0.0
        %987 = vmatprep.subr.mxu0 0.0
        %988 = vmatpush2.msra.mxu0 0.0
        %989 = vmatprep.subr.mxu0 0.0
        %990 = vmatpush2.msra.mxu0 0.0
        %991 = vmatprep.subr.mxu0 0.0
        %992 = vmatpush2.msra.mxu0 0.0
        %993 = vmatprep.subr.mxu0 0.0
        %994 = vmatpush2.msra.mxu0 0.0
        %995 = vmatprep.subr.mxu0 0.0
        %996 = vmatpush2.msra.mxu0 0.0
        %997 = vmatprep.subr.mxu0 0.0
        %998 = vmatpush2.msra.mxu0 0.0
        %999 = vmatprep.subr.mxu0 0.0
        %1000 = vmatpush2.msra.mxu0 0.0
        %1001 = vmatprep.subr.mxu0 0.0
        %1002 = vmatpush2.msra.mxu0 0.0
        %1003 = vmatprep.subr.mxu0 0.0
        %1004 = vmatpush2.msra.mxu0 0.0
        %1005 = vmatprep.subr.mxu0 0.0
        %1006 = vmatpush2.msra.mxu0 0.0
        %1007 = vmatprep.subr.mxu0 0.0
        %1008 = vmatpush2.msra.mxu0 0.0
        %1009 = vmatprep.subr.mxu0 0.0
        %1010 = vmatpush2.msra.mxu0 0.0
        %1011 = vmatprep.subr.mxu0 0.0
        %1012 = vmatpush2.msra.mxu0 0.0
        %1013 = vmatprep.subr.mxu0 0.0
        %1014 = vmatpush2.msra.mxu0 0.0
        %1015 = vmatprep.mubr.f32.mxu0 0.0
        %1016 = vmatmul.mubr.f32.gmra.mxu0 %v937
        %v1017 = vpop.f32.mrf.mxu0
        %v1018 = vadd.f32 0.0, %v1017
        %v1019 = vpop.f32.mrf.mxu0
        %1020 = vmatprep.mubr.f32.mxu0 0.0
        %1021 = vmatmul.mubr.f32.gmra.mxu0 %v940
        %v1022 = vpop.f32.mrf.mxu0
        %v1023 = vadd.f32 0.0, %v1022
        %v1024 = vpop.f32.mrf.mxu0
        %1025 = vmatprep.mubr.f32.mxu0 0.0
        %1026 = vmatmul.mubr.f32.gmra.mxu0 %v943
        %v1027 = vpop.f32.mrf.mxu0
        %v1028 = vadd.f32 0.0, %v1027
        %v1029 = vpop.f32.mrf.mxu0
        %1030 = vmatprep.mubr.f32.mxu0 0.0
        %1031 = vmatmul.mubr.f32.gmra.mxu0 %v946
        %v1032 = vpop.f32.mrf.mxu0
        %v1033 = vadd.f32 0.0, %v1032
        %v1034 = vpop.f32.mrf.mxu0
        %1035 = vdwg.mxu0
        %v1036 = vadd.f32 %v916, %v1018
        %v1037 = vadd.f32 %v917, %v1023
        %v1038 = vadd.f32 %v918, %v1028
        %v1039 = vadd.f32 %v919, %v1033
        %s1040 = scalar_lea.vmem %s2, 16
        %v1041 = vld [vmem:[%s1040] sm:$0xf]
        %v1043 = vsel %vm589, %v930, 0
        %v1046 = vsel %vm589, %v931, 0
        %v1049 = vsel %vm589, %v932, 0
        %v1052 = vsel %vm589, %v933, 0
        %v1055 = vsel %vm602, %v1041, 0
        %1057 = vmatprep.subr.mxu0 0.0
        %1058 = vmatpush1.msra.mxu0 0.0
        %1059 = vmatprep.subr.mxu0 0.0
        %1060 = vmatpush1.msra.mxu0 0.0
        %1061 = vmatprep.subr.mxu0 0.0
        %1062 = vmatpush1.msra.mxu0 0.0
        %1063 = vmatprep.subr.mxu0 0.0
        %1064 = vmatpush1.msra.mxu0 0.0
        %1065 = vmatprep.subr.mxu0 0.0
        %1066 = vmatpush1.msra.mxu0 0.0
        %1067 = vmatprep.subr.mxu0 0.0
        %1068 = vmatpush1.msra.mxu0 0.0
        %1069 = vmatprep.subr.mxu0 0.0
        %1070 = vmatpush1.msra.mxu0 0.0
        %1071 = vmatprep.subr.mxu0 0.0
        %1072 = vmatpush1.msra.mxu0 0.0
        %1073 = vmatprep.subr.mxu0 0.0
        %1074 = vmatpush1.msra.mxu0 0.0
        %1075 = vmatprep.subr.mxu0 0.0
        %1076 = vmatpush1.msra.mxu0 0.0
        %1077 = vmatprep.subr.mxu0 0.0
        %1078 = vmatpush1.msra.mxu0 0.0
        %1079 = vmatprep.subr.mxu0 0.0
        %1080 = vmatpush1.msra.mxu0 0.0
        %1081 = vmatprep.subr.mxu0 0.0
        %1082 = vmatpush1.msra.mxu0 0.0
        %1083 = vmatprep.subr.mxu0 0.0
        %1084 = vmatpush1.msra.mxu0 0.0
        %1085 = vmatprep.subr.mxu0 0.0
        %1086 = vmatpush1.msra.mxu0 0.0
        %1087 = vmatprep.subr.mxu0 0.0
        %1088 = vmatpush1.msra.mxu0 %v1055
        %1089 = vmatprep.subr.mxu0 0.0
        %1090 = vmatpush2.msra.mxu0 0.0
        %1091 = vmatprep.subr.mxu0 0.0
        %1092 = vmatpush2.msra.mxu0 0.0
        %1093 = vmatprep.subr.mxu0 0.0
        %1094 = vmatpush2.msra.mxu0 0.0
        %1095 = vmatprep.subr.mxu0 0.0
        %1096 = vmatpush2.msra.mxu0 0.0
        %1097 = vmatprep.subr.mxu0 0.0
        %1098 = vmatpush2.msra.mxu0 0.0
        %1099 = vmatprep.subr.mxu0 0.0
        %1100 = vmatpush2.msra.mxu0 0.0
        %1101 = vmatprep.subr.mxu0 0.0
        %1102 = vmatpush2.msra.mxu0 0.0
        %1103 = vmatprep.subr.mxu0 0.0
        %1104 = vmatpush2.msra.mxu0 0.0
        %1105 = vmatprep.subr.mxu0 0.0
        %1106 = vmatpush2.msra.mxu0 0.0
        %1107 = vmatprep.subr.mxu0 0.0
        %1108 = vmatpush2.msra.mxu0 0.0
        %1109 = vmatprep.subr.mxu0 0.0
        %1110 = vmatpush2.msra.mxu0 0.0
        %1111 = vmatprep.subr.mxu0 0.0
        %1112 = vmatpush2.msra.mxu0 0.0
        %1113 = vmatprep.subr.mxu0 0.0
        %1114 = vmatpush2.msra.mxu0 0.0
        %1115 = vmatprep.subr.mxu0 0.0
        %1116 = vmatpush2.msra.mxu0 0.0
        %1117 = vmatprep.subr.mxu0 0.0
        %1118 = vmatpush2.msra.mxu0 0.0
        %1119 = vmatprep.subr.mxu0 0.0
        %1120 = vmatpush2.msra.mxu0 0.0
        %1121 = vmatprep.mubr.f32.mxu0 0.0
        %1122 = vmatmul.mubr.f32.gmra.mxu0 %v1043
        %v1123 = vpop.f32.mrf.mxu0
        %v1124 = vadd.f32 0.0, %v1123
        %v1125 = vpop.f32.mrf.mxu0
        %1126 = vmatprep.mubr.f32.mxu0 0.0
        %1127 = vmatmul.mubr.f32.gmra.mxu0 %v1046
        %v1128 = vpop.f32.mrf.mxu0
        %v1129 = vadd.f32 0.0, %v1128
        %v1130 = vpop.f32.mrf.mxu0
        %1131 = vmatprep.mubr.f32.mxu0 0.0
        %1132 = vmatmul.mubr.f32.gmra.mxu0 %v1049
        %v1133 = vpop.f32.mrf.mxu0
        %v1134 = vadd.f32 0.0, %v1133
        %v1135 = vpop.f32.mrf.mxu0
        %1136 = vmatprep.mubr.f32.mxu0 0.0
        %1137 = vmatmul.mubr.f32.gmra.mxu0 %v1052
        %v1138 = vpop.f32.mrf.mxu0
        %v1139 = vadd.f32 0.0, %v1138
        %v1140 = vpop.f32.mrf.mxu0
        %1141 = vdwg.mxu0
        %v1142 = vadd.f32 %v1036, %v1124
        %v1143 = vadd.f32 %v1037, %v1129
        %v1144 = vadd.f32 %v1038, %v1134
        %v1145 = vadd.f32 %v1039, %v1139
        %v1150 = vrot.slane %v921, 1
        %v1151 = vrot.slane %v922, 1
        %v1152 = vsel %vm805, %v1150, %v1151
        %v1153 = vrot.slane %v923, 1
        %v1154 = vrot.slane %v924, 1
        %v1155 = vsel %vm805, %v1153, %v1154
        %v1156 = vrot.slane %v925, 1
        %v1157 = vrot.slane %v926, 1
        %v1158 = vsel %vm805, %v1156, %v1157
        %v1159 = vrot.slane %v927, 1
        %v1160 = vrot.slane %v928, 1
        %v1161 = vsel %vm805, %v1159, %v1160
        %s1162 = scalar_lea.vmem %s2, 20
        %v1163 = vld [vmem:[%s1162] sm:$0xf]
        %v1164 = vsel %vm589, %v1152, 0
        %v1166 = vsel %vm589, %v1155, 0
        %v1168 = vsel %vm589, %v1158, 0
        %v1170 = vsel %vm589, %v1161, 0
        %v1173 = vsel %vm602, %v1163, 0
        %1175 = vmatprep.subr.mxu0 0.0
        %1176 = vmatpush1.msra.mxu0 0.0
        %1177 = vmatprep.subr.mxu0 0.0
        %1178 = vmatpush1.msra.mxu0 0.0
        %1179 = vmatprep.subr.mxu0 0.0
        %1180 = vmatpush1.msra.mxu0 0.0
        %1181 = vmatprep.subr.mxu0 0.0
        %1182 = vmatpush1.msra.mxu0 0.0
        %1183 = vmatprep.subr.mxu0 0.0
        %1184 = vmatpush1.msra.mxu0 0.0
        %1185 = vmatprep.subr.mxu0 0.0
        %1186 = vmatpush1.msra.mxu0 0.0
        %1187 = vmatprep.subr.mxu0 0.0
        %1188 = vmatpush1.msra.mxu0 0.0
        %1189 = vmatprep.subr.mxu0 0.0
        %1190 = vmatpush1.msra.mxu0 0.0
        %1191 = vmatprep.subr.mxu0 0.0
        %1192 = vmatpush1.msra.mxu0 0.0
        %1193 = vmatprep.subr.mxu0 0.0
        %1194 = vmatpush1.msra.mxu0 0.0
        %1195 = vmatprep.subr.mxu0 0.0
        %1196 = vmatpush1.msra.mxu0 0.0
        %1197 = vmatprep.subr.mxu0 0.0
        %1198 = vmatpush1.msra.mxu0 0.0
        %1199 = vmatprep.subr.mxu0 0.0
        %1200 = vmatpush1.msra.mxu0 0.0
        %1201 = vmatprep.subr.mxu0 0.0
        %1202 = vmatpush1.msra.mxu0 0.0
        %1203 = vmatprep.subr.mxu0 0.0
        %1204 = vmatpush1.msra.mxu0 0.0
        %1205 = vmatprep.subr.mxu0 0.0
        %1206 = vmatpush1.msra.mxu0 %v1173
        %1207 = vmatprep.subr.mxu0 0.0
        %1208 = vmatpush2.msra.mxu0 0.0
        %1209 = vmatprep.subr.mxu0 0.0
        %1210 = vmatpush2.msra.mxu0 0.0
        %1211 = vmatprep.subr.mxu0 0.0
        %1212 = vmatpush2.msra.mxu0 0.0
        %1213 = vmatprep.subr.mxu0 0.0
        %1214 = vmatpush2.msra.mxu0 0.0
        %1215 = vmatprep.subr.mxu0 0.0
        %1216 = vmatpush2.msra.mxu0 0.0
        %1217 = vmatprep.subr.mxu0 0.0
        %1218 = vmatpush2.msra.mxu0 0.0
        %1219 = vmatprep.subr.mxu0 0.0
        %1220 = vmatpush2.msra.mxu0 0.0
        %1221 = vmatprep.subr.mxu0 0.0
        %1222 = vmatpush2.msra.mxu0 0.0
        %1223 = vmatprep.subr.mxu0 0.0
        %1224 = vmatpush2.msra.mxu0 0.0
        %1225 = vmatprep.subr.mxu0 0.0
        %1226 = vmatpush2.msra.mxu0 0.0
        %1227 = vmatprep.subr.mxu0 0.0
        %1228 = vmatpush2.msra.mxu0 0.0
        %1229 = vmatprep.subr.mxu0 0.0
        %1230 = vmatpush2.msra.mxu0 0.0
        %1231 = vmatprep.subr.mxu0 0.0
        %1232 = vmatpush2.msra.mxu0 0.0
        %1233 = vmatprep.subr.mxu0 0.0
        %1234 = vmatpush2.msra.mxu0 0.0
        %1235 = vmatprep.subr.mxu0 0.0
        %1236 = vmatpush2.msra.mxu0 0.0
        %1237 = vmatprep.subr.mxu0 0.0
        %1238 = vmatpush2.msra.mxu0 0.0
        %1239 = vmatprep.mubr.f32.mxu0 0.0
        %1240 = vmatmul.mubr.f32.gmra.mxu0 %v1164
        %v1241 = vpop.f32.mrf.mxu0
        %v1242 = vadd.f32 0.0, %v1241
        %v1243 = vpop.f32.mrf.mxu0
        %1244 = vmatprep.mubr.f32.mxu0 0.0
        %1245 = vmatmul.mubr.f32.gmra.mxu0 %v1166
        %v1246 = vpop.f32.mrf.mxu0
        %v1247 = vadd.f32 0.0, %v1246
        %v1248 = vpop.f32.mrf.mxu0
        %1249 = vmatprep.mubr.f32.mxu0 0.0
        %1250 = vmatmul.mubr.f32.gmra.mxu0 %v1168
        %v1251 = vpop.f32.mrf.mxu0
        %v1252 = vadd.f32 0.0, %v1251
        %v1253 = vpop.f32.mrf.mxu0
        %1254 = vmatprep.mubr.f32.mxu0 0.0
        %1255 = vmatmul.mubr.f32.gmra.mxu0 %v1170
        %v1256 = vpop.f32.mrf.mxu0
        %v1257 = vadd.f32 0.0, %v1256
        %v1258 = vpop.f32.mrf.mxu0
        %1259 = vdwg.mxu0
        %v1260 = vadd.f32 %v1142, %v1242
        %v1261 = vadd.f32 %v1143, %v1247
        %v1262 = vadd.f32 %v1144, %v1252
        %v1263 = vadd.f32 %v1145, %v1257
        %s1264 = scalar_lea.vmem %s514, 16 [#allocation2]
        %v1265 = vld [vmem:[%s1264] sm:$0xff]
        %v1266 = vld [vmem:[%s1264 + $0x8] sm:$0x1]
        %v1267 = vld [vmem:[%s1264 + $0x10] sm:$0xff]
        %v1268 = vld [vmem:[%s1264 + $0x18] sm:$0x1]
        %v1269 = vld [vmem:[%s1264 + $0x20] sm:$0xff]
        %v1270 = vld [vmem:[%s1264 + $0x28] sm:$0x1]
        %v1271 = vld [vmem:[%s521] sm:$0xff]
        %v1272 = vld [vmem:[%s521 + $0x8] sm:$0x1]
        %s1273 = scalar_lea.vmem %s514, 80 [#allocation2]
        %v1274 = vld [vmem:[%s1273] sm:$0xff]
        %v1275 = vld [vmem:[%s1273 + $0x10] sm:$0xff]
        %v1276 = vld [vmem:[%s1273 + $0x20] sm:$0xff]
        %s1277 = scalar_lea.vmem %s521, 16 [#allocation3]
        %v1278 = vld [vmem:[%s1277] sm:$0xff]
        %s1279 = scalar_lea.vmem %s2, 24
        %v1280 = vld [vmem:[%s1279] sm:$0xf]
        %v1282 = vsel %vm589, %v1265, 0
        %v1285 = vsel %vm589, %v1267, 0
        %v1288 = vsel %vm589, %v1269, 0
        %v1291 = vsel %vm589, %v1271, 0
        %v1294 = vsel %vm602, %v1280, 0
        %1296 = vmatprep.subr.mxu0 0.0
        %1297 = vmatpush1.msra.mxu0 0.0
        %1298 = vmatprep.subr.mxu0 0.0
        %1299 = vmatpush1.msra.mxu0 0.0
        %1300 = vmatprep.subr.mxu0 0.0
        %1301 = vmatpush1.msra.mxu0 0.0
        %1302 = vmatprep.subr.mxu0 0.0
        %1303 = vmatpush1.msra.mxu0 0.0
        %1304 = vmatprep.subr.mxu0 0.0
        %1305 = vmatpush1.msra.mxu0 0.0
        %1306 = vmatprep.subr.mxu0 0.0
        %1307 = vmatpush1.msra.mxu0 0.0
        %1308 = vmatprep.subr.mxu0 0.0
        %1309 = vmatpush1.msra.mxu0 0.0
        %1310 = vmatprep.subr.mxu0 0.0
        %1311 = vmatpush1.msra.mxu0 0.0
        %1312 = vmatprep.subr.mxu0 0.0
        %1313 = vmatpush1.msra.mxu0 0.0
        %1314 = vmatprep.subr.mxu0 0.0
        %1315 = vmatpush1.msra.mxu0 0.0
        %1316 = vmatprep.subr.mxu0 0.0
        %1317 = vmatpush1.msra.mxu0 0.0
        %1318 = vmatprep.subr.mxu0 0.0
        %1319 = vmatpush1.msra.mxu0 0.0
        %1320 = vmatprep.subr.mxu0 0.0
        %1321 = vmatpush1.msra.mxu0 0.0
        %1322 = vmatprep.subr.mxu0 0.0
        %1323 = vmatpush1.msra.mxu0 0.0
        %1324 = vmatprep.subr.mxu0 0.0
        %1325 = vmatpush1.msra.mxu0 0.0
        %1326 = vmatprep.subr.mxu0 0.0
        %1327 = vmatpush1.msra.mxu0 %v1294
        %1328 = vmatprep.subr.mxu0 0.0
        %1329 = vmatpush2.msra.mxu0 0.0
        %1330 = vmatprep.subr.mxu0 0.0
        %1331 = vmatpush2.msra.mxu0 0.0
        %1332 = vmatprep.subr.mxu0 0.0
        %1333 = vmatpush2.msra.mxu0 0.0
        %1334 = vmatprep.subr.mxu0 0.0
        %1335 = vmatpush2.msra.mxu0 0.0
        %1336 = vmatprep.subr.mxu0 0.0
        %1337 = vmatpush2.msra.mxu0 0.0
        %1338 = vmatprep.subr.mxu0 0.0
        %1339 = vmatpush2.msra.mxu0 0.0
        %1340 = vmatprep.subr.mxu0 0.0
        %1341 = vmatpush2.msra.mxu0 0.0
        %1342 = vmatprep.subr.mxu0 0.0
        %1343 = vmatpush2.msra.mxu0 0.0
        %1344 = vmatprep.subr.mxu0 0.0
        %1345 = vmatpush2.msra.mxu0 0.0
        %1346 = vmatprep.subr.mxu0 0.0
        %1347 = vmatpush2.msra.mxu0 0.0
        %1348 = vmatprep.subr.mxu0 0.0
        %1349 = vmatpush2.msra.mxu0 0.0
        %1350 = vmatprep.subr.mxu0 0.0
        %1351 = vmatpush2.msra.mxu0 0.0
        %1352 = vmatprep.subr.mxu0 0.0
        %1353 = vmatpush2.msra.mxu0 0.0
        %1354 = vmatprep.subr.mxu0 0.0
        %1355 = vmatpush2.msra.mxu0 0.0
        %1356 = vmatprep.subr.mxu0 0.0
        %1357 = vmatpush2.msra.mxu0 0.0
        %1358 = vmatprep.subr.mxu0 0.0
        %1359 = vmatpush2.msra.mxu0 0.0
        %1360 = vmatprep.mubr.f32.mxu0 0.0
        %1361 = vmatmul.mubr.f32.gmra.mxu0 %v1282
        %v1362 = vpop.f32.mrf.mxu0
        %v1363 = vadd.f32 0.0, %v1362
        %v1364 = vpop.f32.mrf.mxu0
        %1365 = vmatprep.mubr.f32.mxu0 0.0
        %1366 = vmatmul.mubr.f32.gmra.mxu0 %v1285
        %v1367 = vpop.f32.mrf.mxu0
        %v1368 = vadd.f32 0.0, %v1367
        %v1369 = vpop.f32.mrf.mxu0
        %1370 = vmatprep.mubr.f32.mxu0 0.0
        %1371 = vmatmul.mubr.f32.gmra.mxu0 %v1288
        %v1372 = vpop.f32.mrf.mxu0
        %v1373 = vadd.f32 0.0, %v1372
        %v1374 = vpop.f32.mrf.mxu0
        %1375 = vmatprep.mubr.f32.mxu0 0.0
        %1376 = vmatmul.mubr.f32.gmra.mxu0 %v1291
        %v1377 = vpop.f32.mrf.mxu0
        %v1378 = vadd.f32 0.0, %v1377
        %v1379 = vpop.f32.mrf.mxu0
        %1380 = vdwg.mxu0
        %v1381 = vadd.f32 %v1260, %v1363
        %v1382 = vadd.f32 %v1261, %v1368
        %v1383 = vadd.f32 %v1262, %v1373
        %v1384 = vadd.f32 %v1263, %v1378
        %s1385 = scalar_lea.vmem %s2, 28
        %v1386 = vld [vmem:[%s1385] sm:$0xf]
        %v1388 = vsel %vm589, %v1274, 0
        %v1391 = vsel %vm589, %v1275, 0
        %v1394 = vsel %vm589, %v1276, 0
        %v1397 = vsel %vm589, %v1278, 0
        %v1400 = vsel %vm602, %v1386, 0
        %1402 = vmatprep.subr.mxu0 0.0
        %1403 = vmatpush1.msra.mxu0 0.0
        %1404 = vmatprep.subr.mxu0 0.0
        %1405 = vmatpush1.msra.mxu0 0.0
        %1406 = vmatprep.subr.mxu0 0.0
        %1407 = vmatpush1.msra.mxu0 0.0
        %1408 = vmatprep.subr.mxu0 0.0
        %1409 = vmatpush1.msra.mxu0 0.0
        %1410 = vmatprep.subr.mxu0 0.0
        %1411 = vmatpush1.msra.mxu0 0.0
        %1412 = vmatprep.subr.mxu0 0.0
        %1413 = vmatpush1.msra.mxu0 0.0
        %1414 = vmatprep.subr.mxu0 0.0
        %1415 = vmatpush1.msra.mxu0 0.0
        %1416 = vmatprep.subr.mxu0 0.0
        %1417 = vmatpush1.msra.mxu0 0.0
        %1418 = vmatprep.subr.mxu0 0.0
        %1419 = vmatpush1.msra.mxu0 0.0
        %1420 = vmatprep.subr.mxu0 0.0
        %1421 = vmatpush1.msra.mxu0 0.0
        %1422 = vmatprep.subr.mxu0 0.0
        %1423 = vmatpush1.msra.mxu0 0.0
        %1424 = vmatprep.subr.mxu0 0.0
        %1425 = vmatpush1.msra.mxu0 0.0
        %1426 = vmatprep.subr.mxu0 0.0
        %1427 = vmatpush1.msra.mxu0 0.0
        %1428 = vmatprep.subr.mxu0 0.0
        %1429 = vmatpush1.msra.mxu0 0.0
        %1430 = vmatprep.subr.mxu0 0.0
        %1431 = vmatpush1.msra.mxu0 0.0
        %1432 = vmatprep.subr.mxu0 0.0
        %1433 = vmatpush1.msra.mxu0 %v1400
        %1434 = vmatprep.subr.mxu0 0.0
        %1435 = vmatpush2.msra.mxu0 0.0
        %1436 = vmatprep.subr.mxu0 0.0
        %1437 = vmatpush2.msra.mxu0 0.0
        %1438 = vmatprep.subr.mxu0 0.0
        %1439 = vmatpush2.msra.mxu0 0.0
        %1440 = vmatprep.subr.mxu0 0.0
        %1441 = vmatpush2.msra.mxu0 0.0
        %1442 = vmatprep.subr.mxu0 0.0
        %1443 = vmatpush2.msra.mxu0 0.0
        %1444 = vmatprep.subr.mxu0 0.0
        %1445 = vmatpush2.msra.mxu0 0.0
        %1446 = vmatprep.subr.mxu0 0.0
        %1447 = vmatpush2.msra.mxu0 0.0
        %1448 = vmatprep.subr.mxu0 0.0
        %1449 = vmatpush2.msra.mxu0 0.0
        %1450 = vmatprep.subr.mxu0 0.0
        %1451 = vmatpush2.msra.mxu0 0.0
        %1452 = vmatprep.subr.mxu0 0.0
        %1453 = vmatpush2.msra.mxu0 0.0
        %1454 = vmatprep.subr.mxu0 0.0
        %1455 = vmatpush2.msra.mxu0 0.0
        %1456 = vmatprep.subr.mxu0 0.0
        %1457 = vmatpush2.msra.mxu0 0.0
        %1458 = vmatprep.subr.mxu0 0.0
        %1459 = vmatpush2.msra.mxu0 0.0
        %1460 = vmatprep.subr.mxu0 0.0
        %1461 = vmatpush2.msra.mxu0 0.0
        %1462 = vmatprep.subr.mxu0 0.0
        %1463 = vmatpush2.msra.mxu0 0.0
        %1464 = vmatprep.subr.mxu0 0.0
        %1465 = vmatpush2.msra.mxu0 0.0
        %1466 = vmatprep.mubr.f32.mxu0 0.0
        %1467 = vmatmul.mubr.f32.gmra.mxu0 %v1388
        %v1468 = vpop.f32.mrf.mxu0
        %v1469 = vadd.f32 0.0, %v1468
        %v1470 = vpop.f32.mrf.mxu0
        %1471 = vmatprep.mubr.f32.mxu0 0.0
        %1472 = vmatmul.mubr.f32.gmra.mxu0 %v1391
        %v1473 = vpop.f32.mrf.mxu0
        %v1474 = vadd.f32 0.0, %v1473
        %v1475 = vpop.f32.mrf.mxu0
        %1476 = vmatprep.mubr.f32.mxu0 0.0
        %1477 = vmatmul.mubr.f32.gmra.mxu0 %v1394
        %v1478 = vpop.f32.mrf.mxu0
        %v1479 = vadd.f32 0.0, %v1478
        %v1480 = vpop.f32.mrf.mxu0
        %1481 = vmatprep.mubr.f32.mxu0 0.0
        %1482 = vmatmul.mubr.f32.gmra.mxu0 %v1397
        %v1483 = vpop.f32.mrf.mxu0
        %v1484 = vadd.f32 0.0, %v1483
        %v1485 = vpop.f32.mrf.mxu0
        %1486 = vdwg.mxu0
        %v1487 = vadd.f32 %v1381, %v1469
        %v1488 = vadd.f32 %v1382, %v1474
        %v1489 = vadd.f32 %v1383, %v1479
        %v1490 = vadd.f32 %v1384, %v1484
        %v1495 = vrot.slane %v1265, 1
        %v1496 = vrot.slane %v1266, 1
        %v1497 = vsel %vm805, %v1495, %v1496
        %v1498 = vrot.slane %v1267, 1
        %v1499 = vrot.slane %v1268, 1
        %v1500 = vsel %vm805, %v1498, %v1499
        %v1501 = vrot.slane %v1269, 1
        %v1502 = vrot.slane %v1270, 1
        %v1503 = vsel %vm805, %v1501, %v1502
        %v1504 = vrot.slane %v1271, 1
        %v1505 = vrot.slane %v1272, 1
        %v1506 = vsel %vm805, %v1504, %v1505
        %s1507 = scalar_lea.vmem %s2, 32
        %v1508 = vld [vmem:[%s1507] sm:$0xf]
        %v1509 = vsel %vm589, %v1497, 0
        %v1511 = vsel %vm589, %v1500, 0
        %v1513 = vsel %vm589, %v1503, 0
        %v1515 = vsel %vm589, %v1506, 0
        %v1518 = vsel %vm602, %v1508, 0
        %1520 = vmatprep.subr.mxu0 0.0
        %1521 = vmatpush1.msra.mxu0 0.0
        %1522 = vmatprep.subr.mxu0 0.0
        %1523 = vmatpush1.msra.mxu0 0.0
        %1524 = vmatprep.subr.mxu0 0.0
        %1525 = vmatpush1.msra.mxu0 0.0
        %1526 = vmatprep.subr.mxu0 0.0
        %1527 = vmatpush1.msra.mxu0 0.0
        %1528 = vmatprep.subr.mxu0 0.0
        %1529 = vmatpush1.msra.mxu0 0.0
        %1530 = vmatprep.subr.mxu0 0.0
        %1531 = vmatpush1.msra.mxu0 0.0
        %1532 = vmatprep.subr.mxu0 0.0
        %1533 = vmatpush1.msra.mxu0 0.0
        %1534 = vmatprep.subr.mxu0 0.0
        %1535 = vmatpush1.msra.mxu0 0.0
        %1536 = vmatprep.subr.mxu0 0.0
        %1537 = vmatpush1.msra.mxu0 0.0
        %1538 = vmatprep.subr.mxu0 0.0
        %1539 = vmatpush1.msra.mxu0 0.0
        %1540 = vmatprep.subr.mxu0 0.0
        %1541 = vmatpush1.msra.mxu0 0.0
        %1542 = vmatprep.subr.mxu0 0.0
        %1543 = vmatpush1.msra.mxu0 0.0
        %1544 = vmatprep.subr.mxu0 0.0
        %1545 = vmatpush1.msra.mxu0 0.0
        %1546 = vmatprep.subr.mxu0 0.0
        %1547 = vmatpush1.msra.mxu0 0.0
        %1548 = vmatprep.subr.mxu0 0.0
        %1549 = vmatpush1.msra.mxu0 0.0
        %1550 = vmatprep.subr.mxu0 0.0
        %1551 = vmatpush1.msra.mxu0 %v1518
        %1552 = vmatprep.subr.mxu0 0.0
        %1553 = vmatpush2.msra.mxu0 0.0
        %1554 = vmatprep.subr.mxu0 0.0
        %1555 = vmatpush2.msra.mxu0 0.0
        %1556 = vmatprep.subr.mxu0 0.0
        %1557 = vmatpush2.msra.mxu0 0.0
        %1558 = vmatprep.subr.mxu0 0.0
        %1559 = vmatpush2.msra.mxu0 0.0
        %1560 = vmatprep.subr.mxu0 0.0
        %1561 = vmatpush2.msra.mxu0 0.0
        %1562 = vmatprep.subr.mxu0 0.0
        %1563 = vmatpush2.msra.mxu0 0.0
        %1564 = vmatprep.subr.mxu0 0.0
        %1565 = vmatpush2.msra.mxu0 0.0
        %1566 = vmatprep.subr.mxu0 0.0
        %1567 = vmatpush2.msra.mxu0 0.0
        %1568 = vmatprep.subr.mxu0 0.0
        %1569 = vmatpush2.msra.mxu0 0.0
        %1570 = vmatprep.subr.mxu0 0.0
        %1571 = vmatpush2.msra.mxu0 0.0
        %1572 = vmatprep.subr.mxu0 0.0
        %1573 = vmatpush2.msra.mxu0 0.0
        %1574 = vmatprep.subr.mxu0 0.0
        %1575 = vmatpush2.msra.mxu0 0.0
        %1576 = vmatprep.subr.mxu0 0.0
        %1577 = vmatpush2.msra.mxu0 0.0
        %1578 = vmatprep.subr.mxu0 0.0
        %1579 = vmatpush2.msra.mxu0 0.0
        %1580 = vmatprep.subr.mxu0 0.0
        %1581 = vmatpush2.msra.mxu0 0.0
        %1582 = vmatprep.subr.mxu0 0.0
        %1583 = vmatpush2.msra.mxu0 0.0
        %1584 = vmatprep.mubr.f32.mxu0 0.0
        %1585 = vmatmul.mubr.f32.gmra.mxu0 %v1509
        %v1586 = vpop.f32.mrf.mxu0
        %v1587 = vadd.f32 0.0, %v1586
        %v1588 = vpop.f32.mrf.mxu0
        %1589 = vmatprep.mubr.f32.mxu0 0.0
        %1590 = vmatmul.mubr.f32.gmra.mxu0 %v1511
        %v1591 = vpop.f32.mrf.mxu0
        %v1592 = vadd.f32 0.0, %v1591
        %v1593 = vpop.f32.mrf.mxu0
        %1594 = vmatprep.mubr.f32.mxu0 0.0
        %1595 = vmatmul.mubr.f32.gmra.mxu0 %v1513
        %v1596 = vpop.f32.mrf.mxu0
        %v1597 = vadd.f32 0.0, %v1596
        %v1598 = vpop.f32.mrf.mxu0
        %1599 = vmatprep.mubr.f32.mxu0 0.0
        %1600 = vmatmul.mubr.f32.gmra.mxu0 %v1515
        %v1601 = vpop.f32.mrf.mxu0
        %v1602 = vadd.f32 0.0, %v1601
        %v1603 = vpop.f32.mrf.mxu0
        %1604 = vdwg.mxu0
        %v1605 = vadd.f32 %v1487, %v1587
        %v1606 = vadd.f32 %v1488, %v1592
        %v1607 = vadd.f32 %v1489, %v1597
        %v1608 = vadd.f32 %v1490, %v1602
        %1609 = vst.msk [vmem:[%s566] sm:$0xff] %vm589, %v1605
        %1610 = vst.msk [vmem:[%s566 + $0x8] sm:$0xff] %vm589, %v1606
        %1611 = vst.msk [vmem:[%s566 + $0x10] sm:$0xff] %vm589, %v1607
        %1612 = vst.msk [vmem:[%s566 + $0x18] sm:$0xff] %vm589, %v1608
        %s1613 = smul.u32 4, %s20
        %p1614 = scmp.lt.s32.totalorder %s19, 1
        %s1615 = scalar_select %p1614, %s19, 1
        %p1616 = scmp.lt.s32.totalorder %s1613, 7
        %s1617 = scalar_select %p1616, %s1613, 7
        %s1618 = smul.addr %s1615, 8
        %s1619 = sadd.s32 %s1617, %s1618
        %s1620 = smul.addr %s1619, 8
        %s1621 = scalar_lea.vmem %s4, %s1620
        // Predicated region
        $region127: #{tpu_custom_call.1} parent=117 // pred_check
          %p1622 = pneg %p145
        $region128: #{tpu_custom_call.1} parent=117 // pred_check_branch
          %1624 = sbr.rel (%p1622) target = $region130
        $region129: #{tpu_custom_call.1} parent=117 // pred_region
          %s1625 = smul.u32 4, %s20
        $region130: #{tpu_custom_call.1} parent=117 // pred_fallthru
          _
      $region118: #{tpu_custom_call.1} parent=5 // pred_fallthru
        _
      %p1626 = scmp.le.s32.totalorder 2, %s10
      // Predicated region
      $region131: #{tpu_custom_call.1} parent=5 // pred_check
        %p1627 = pneg %p1626
      $region132: #{tpu_custom_call.1} parent=5 // pred_check_branch
        %1629 = sbr.rel (%p1627) target = $region134
      $region133: #{tpu_custom_call.1} parent=5 // pred_region
        %s1630 = ssub.s32 %s10, 2
        // Predicated region
        $region135: #{tpu_custom_call.1} parent=133 // pred_check
          %p1631 = pneg %p151
        $region136: #{tpu_custom_call.1} parent=133 // pred_check_branch
          %1633 = sbr.rel (%p1631) target = $region138
        $region137: #{tpu_custom_call.1} parent=133 // pred_region
          %s1634 = smul.u32 4, %s22
          %p1635 = scmp.lt.s32.totalorder %s21, 1
          %s1636 = scalar_select %p1635, %s21, 1
          %p1637 = scmp.lt.s32.totalorder %s1634, 7
          %s1638 = scalar_select %p1637, %s1634, 7
          %s1639 = smul.addr %s1636, 8
          %s1640 = sadd.s32 %s1638, %s1639
          %s1641 = smul.addr %s1640, 8
          %s1642 = scalar_lea.vmem %s4, %s1641
        $region138: #{tpu_custom_call.1} parent=133 // pred_fallthru
          _
      $region134: #{tpu_custom_call.1} parent=5 // pred_fallthru
        _
    $region6: #{tpu_custom_call.1} parent=1 // loop_footer
      %s14 = sadd.s32 1, %s10
    $region7: #{tpu_custom_call.1} parent=1 // loop_footer_branch
      %9 = sbr.rel target = $region3
    $region8: #{tpu_custom_call.1} parent=1 // loop_exit
      _

</llo_original>
